<compile_context>
chip_gen: v7x
topology: tpu7x:2x2x1
jax: 0.10.0
libtpu: 0.0.40
codegen_flags: <defaults>
</compile_context>

<pallas_src>
import functools
from typing import NamedTuple

import jax
import jax.numpy as jnp
from jax.experimental import pallas as pl
from jax.experimental.pallas import tpu as pltpu

_LANE = 128
_MIB = 1024 * 1024
# Below this many output-element * K products, XLA's fused matmul wins
# (pallas_call launch/step overhead dominates sub-microsecond matmuls).
_SMALL_PROBLEM_ELEMS = 1 << 21


def _round_up(a: int, b: int) -> int:
    return ((a + b - 1) // b) * b


def _sublane(dtype) -> int:
    # 8 for f32, 16 for bf16, 32 for int8/fp8 (packed-dtype sublane tiling).
    return max(8, 32 // max(jnp.dtype(dtype).itemsize, 1))


def _pick_tile(dim: int, max_tile: int, align: int) -> int:
    """Largest multiple of `align` that divides `dim` and is <= max_tile."""
    best = align
    t = align
    lim = min(max_tile, dim)
    while t <= lim:
        if dim % t == 0:
            best = t
        t += align
    return best


# ---------------------------------------------------------------------------
# Kernels
# ---------------------------------------------------------------------------
def _linear_kernel_inplace(x_ref, w_ref, b_ref, o_ref):
    """f32 output: the resident output block IS the accumulator."""
    k = pl.program_id(2)

    @pl.when(k == 0)
    def _init():
        o_ref[...] = jnp.zeros_like(o_ref)

    o_ref[...] += jnp.dot(x_ref[...], w_ref[...],
                          preferred_element_type=jnp.float32)

    @pl.when(k == pl.num_programs(2) - 1)
    def _bias():
        o_ref[...] += b_ref[...]           # (1, tn) broadcast over rows


def _linear_kernel_acc(x_ref, w_ref, b_ref, o_ref, acc_ref):
    """Narrow output dtype: accumulate in f32 scratch, cast on the last step."""
    k = pl.program_id(2)

    @pl.when(k == 0)
    def _init():
        acc_ref[...] = jnp.zeros_like(acc_ref)

    acc_ref[...] += jnp.dot(x_ref[...], w_ref[...],
                            preferred_element_type=jnp.float32)

    @pl.when(k == pl.num_programs(2) - 1)
    def _finalize():
        o_ref[...] = (acc_ref[...] + b_ref[...]).astype(o_ref.dtype)


# ---------------------------------------------------------------------------
# Parameter packing (done ONCE, outside the per-call hot path)
# ---------------------------------------------------------------------------
class LinearParams(NamedTuple):
    w_t: jax.Array        # (Kp, Np) pre-transposed, lane-padded, compute dtype
    bias: jax.Array       # (1, Np)  float32, lane-padded
    in_features: int
    out_features: int


def prepare_linear_params(weight: jax.Array, bias: jax.Array,
                          compute_dtype=jnp.bfloat16) -> LinearParams:
    """weight: (out_features, in_features), bias: (out_features,)."""
    N, K = weight.shape
    Kp = _round_up(K, _LANE)
    Np = _round_up(N, _LANE)
    w_t = jnp.asarray(weight).T.astype(compute_dtype)          # (K, N)
    if Kp != K or Np != N:
        w_t = jnp.pad(w_t, ((0, Kp - K), (0, Np - N)))
    b = jnp.asarray(bias).astype(jnp.float32)
    if Np != N:
        b = jnp.pad(b, (0, Np - N))
    return LinearParams(w_t=w_t, bias=b.reshape(1, Np),
                        in_features=K, out_features=N)


# ---------------------------------------------------------------------------
# Pallas path
# ---------------------------------------------------------------------------
@functools.partial(jax.jit,
                   static_argnames=("out_features", "tm_max", "tn_max", "tk_max"))
def _linear_padded(x, w_t, bias2d, *, out_features, tm_max, tn_max, tk_max):
    B, K = x.shape
    Kp, Np = w_t.shape
    compute_dtype = w_t.dtype
    out_dtype = x.dtype
    cbytes = jnp.dtype(compute_dtype).itemsize
    obytes = jnp.dtype(out_dtype).itemsize

    sub = _sublane(compute_dtype)
    Mp = _round_up(B, sub)

    # Largest aligned tiles that DIVIDE the (padded) dims -> no extra zero
    # compute and (usually) no per-call pad of x beyond sublane alignment.
    tm = _pick_tile(Mp, tm_max, sub)
    tn = _pick_tile(Np, tn_max, _LANE)
    tk = _pick_tile(Kp, tk_max, _LANE)

    # Keep >= 2 parallel (i, j) blocks so megacore (v7x: 2 TCs) has work.
    if (Mp // tm) * (Np // tn) < 2:
        if Np >= 2 * _LANE:
            tn = _pick_tile(Np, max(_LANE, Np // 2), _LANE)
        elif Mp >= 2 * sub:
            tm = _pick_tile(Mp, max(sub, Mp // 2), sub)

    # Cast then pad the activation (pad is a no-op when B, K already aligned).
    x_c = x.astype(compute_dtype)
    if Mp != B or Kp != K:
        x_c = jnp.pad(x_c, ((0, Mp - B), (0, Kp - K)))

    grid = (Mp // tm, Np // tn, Kp // tk)

    # Weight streaming dominates in the small-M regime -> deeper pipelining.
    w_index = lambda i, j, k: (k, j)
    w_bufs = 2
    if Mp <= 128 and hasattr(pl, "Buffered"):
        try:
            w_spec = pl.BlockSpec((tk, tn), w_index, pipeline_mode=pl.Buffered(3))
            w_bufs = 3
        except TypeError:
            w_spec = pl.BlockSpec((tk, tn), w_index)
    else:
        w_spec = pl.BlockSpec((tk, tn), w_index)

    inplace = out_dtype == jnp.float32
    kernel = _linear_kernel_inplace if inplace else _linear_kernel_acc
    scratch = [] if inplace else [pltpu.VMEM((tm, tn), jnp.float32)]

    vmem_bytes = (2 * tm * tk * cbytes            # x double buffer
                  + w_bufs * tk * tn * cbytes     # weight buffers
                  + 2 * tm * tn * obytes          # output double buffer
                  + 2 * tn * 4                    # bias
                  + (0 if inplace else tm * tn * 4))
    vmem_limit = int(min(48 * _MIB, max(vmem_bytes + 8 * _MIB, 24 * _MIB)))

    cost = pl.CostEstimate(
        flops=2 * Mp * Np * Kp,
        transcendentals=0,
        bytes_accessed=(x_c.size * cbytes * (Np // tn)     # x re-streamed per N block
                        + w_t.size * cbytes * (Mp // tm)   # w re-streamed per M block
                        + bias2d.size * 4
                        + Mp * Np * obytes),
    )

    out_padded = pl.pallas_call(
        kernel,
        out_shape=jax.ShapeDtypeStruct((Mp, Np), out_dtype),
        grid_spec=pltpu.PrefetchScalarGridSpec(
            num_scalar_prefetch=0,
            grid=grid,
            in_specs=[
                pl.BlockSpec((tm, tk), lambda i, j, k: (i, k)),   # x tile
                w_spec,                                           # w.T tile
                pl.BlockSpec((1, tn), lambda i, j, k: (0, j)),    # bias tile
            ],
            out_specs=pl.BlockSpec((tm, tn), lambda i, j, k: (i, j)),
            scratch_shapes=scratch,
        ),
        compiler_params=pltpu.CompilerParams(
            dimension_semantics=("parallel", "parallel", "arbitrary"),
            vmem_limit_bytes=vmem_limit,
        ),
        cost_estimate=cost,
    )(x_c, w_t, bias2d)

    return out_padded[:B, :out_features]


def linear(x: jax.Array, params: LinearParams, *,
           tm: int = 512, tn: int = 512, tk: int = 1024) -> jax.Array:
    """forward(x) = x @ weight.T + bias, with weight/bias pre-packed."""
    B, K = x.shape
    assert K == params.in_features, "in_features mismatch"
    N = params.out_features

    # Tiny layers: pallas_call fixed overhead dominates -> plain XLA matmul.
    if B * K * N < _SMALL_PROBLEM_ELEMS:
        w = params.w_t[:K, :N]
        y = jnp.dot(x.astype(params.w_t.dtype), w,
                    preferred_element_type=jnp.float32) + params.bias[0, :N]
        return y.astype(x.dtype)

    return _linear_padded(x, params.w_t, params.bias,
                          out_features=N, tm_max=tm, tn_max=tn, tk_max=tk)


# ---------------------------------------------------------------------------
# Self-test
# ---------------------------------------------------------------------------
if __name__ == "__main__":

    def ref_forward(x, weight, bias):
        # Reference with the same bf16 operand rounding, f32 accumulation.
        xc = x.astype(jnp.bfloat16)
        wc = weight.T.astype(jnp.bfloat16)
        y = jnp.dot(xc, wc, preferred_element_type=jnp.float32) + bias
        return y.astype(x.dtype)

    def run_case(key, batch, in_features, out_features, x_dtype):
        kw, kb, kx = jax.random.split(key, 3)
        weight = jax.random.normal(kw, (out_features, in_features), dtype=jnp.float32)
        bias = 0.1 * jax.random.normal(kb, (out_features,), dtype=jnp.float32)
        params = prepare_linear_params(weight, bias)          # one-time packing
        x = jax.random.normal(kx, (batch, in_features), dtype=jnp.float32).astype(x_dtype)

        out = jax.block_until_ready(linear(x, params))
        assert out.shape == (batch, out_features)
        assert out.dtype == x_dtype

        ref = ref_forward(x, weight, bias)
        ok = jnp.allclose(out.astype(jnp.float32), ref.astype(jnp.float32),
                          atol=0.1, rtol=2e-2)
        assert bool(ok), f"mismatch vs reference for case {(batch, in_features, out_features, x_dtype)}"

    key = jax.random.PRNGKey(0)
    keys = jax.random.split(key, 4)
    run_case(keys[0], 8, 32, 64, jnp.float32)       # tiny -> XLA bypass path
    run_case(keys[1], 200, 300, 150, jnp.float32)   # unaligned dims -> padded tiles, 2 N-blocks
    run_case(keys[2], 64, 1024, 512, jnp.float32)   # small-M weight-streaming regime (Buffered(3))
    run_case(keys[3], 128, 512, 384, jnp.bfloat16)  # bf16 output -> scratch-accumulator kernel

    print("KERNEL_OK")
</pallas_src>

<mosaic_0001>
module attributes {stable_mosaic.version = 11 : i64} {
  func.func @_linear_kernel_inplace(%arg0: i32, %arg1: i32, %arg2: i32, %arg3: memref<208x384xbf16, #tpu.memory_space<vmem>>, %arg4: memref<384x128xbf16, #tpu.memory_space<vmem>>, %arg5: memref<1x128xf32, #tpu.memory_space<vmem>>, %arg6: memref<208x128xf32, #tpu.memory_space<vmem>>) attributes {dimension_semantics = [#tpu.dimension_semantics<parallel>, #tpu.dimension_semantics<parallel>, #tpu.dimension_semantics<arbitrary>], iteration_bounds = array<i64: 1, 2, 1>, scalar_prefetch = 0 : i64, scratch_operands = 0 : i64, tpu.core_type = #tpu.core_type<tc>, window_params = [{transform_indices = @transform_0, window_bounds = array<i64: 208, 384>}, {transform_indices = @transform_1, window_bounds = array<i64: 384, 128>}, {transform_indices = @transform_2, window_bounds = array<i64: 1, 128>}, {transform_indices = @transform_3, window_bounds = array<i64: 208, 128>}]} {
    %c0_i32 = arith.constant 0 : i32
    %0 = arith.cmpi eq, %arg2, %c0_i32 : i32
    %1 = arith.extui %0 : i1 to i32
    %c0_i32_0 = arith.constant 0 : i32
    %2 = arith.cmpi ne, %1, %c0_i32_0 : i32
    scf.if %2 {
      %cst_10 = arith.constant 0.000000e+00 : f32
      %12 = vector.broadcast %cst_10 : f32 to vector<208x128xf32>
      %c0_11 = arith.constant 0 : index
      %c0_12 = arith.constant 0 : index
      %13 = vector.load %arg6[%c0_11, %c0_12] : memref<208x128xf32, #tpu.memory_space<vmem>>, vector<208x128xf32>
      tpu.vector_store %arg6[%c0_11, %c0_12], %12 {strides = array<i32>} : memref<208x128xf32, #tpu.memory_space<vmem>>, vector<208x128xf32>,
    } else {
    }
    %c0 = arith.constant 0 : index
    %c0_1 = arith.constant 0 : index
    %3 = vector.load %arg6[%c0, %c0_1] : memref<208x128xf32, #tpu.memory_space<vmem>>, vector<208x128xf32>
    %c0_2 = arith.constant 0 : index
    %c0_3 = arith.constant 0 : index
    %4 = vector.load %arg3[%c0_2, %c0_3] : memref<208x384xbf16, #tpu.memory_space<vmem>>, vector<208x384xbf16>
    %c0_4 = arith.constant 0 : index
    %c0_5 = arith.constant 0 : index
    %5 = vector.load %arg4[%c0_4, %c0_5] : memref<384x128xbf16, #tpu.memory_space<vmem>>, vector<384x128xbf16>
    %cst = arith.constant dense<0.000000e+00> : vector<208x128xf32>
    %6 = tpu.matmul %4, %5, %cst {dimension_numbers = #tpu.dot_dimension_numbers<[1], [0], [0], [1], [0, 0, 1, 1], [], []>} : vector<208x384xbf16>, vector<384x128xbf16>, vector<208x128xf32> -> vector<208x128xf32>
    %7 = arith.addf %3, %6 : vector<208x128xf32>
    %c0_6 = arith.constant 0 : index
    %c0_7 = arith.constant 0 : index
    %8 = vector.load %arg6[%c0_6, %c0_7] : memref<208x128xf32, #tpu.memory_space<vmem>>, vector<208x128xf32>
    tpu.vector_store %arg6[%c0_6, %c0_7], %7 {strides = array<i32>} : memref<208x128xf32, #tpu.memory_space<vmem>>, vector<208x128xf32>,
    %c0_i32_8 = arith.constant 0 : i32
    %9 = arith.cmpi eq, %arg2, %c0_i32_8 : i32
    %10 = arith.extui %9 : i1 to i32
    %c0_i32_9 = arith.constant 0 : i32
    %11 = arith.cmpi ne, %10, %c0_i32_9 : i32
    scf.if %11 {
      %c0_10 = arith.constant 0 : index
      %c0_11 = arith.constant 0 : index
      %12 = vector.load %arg6[%c0_10, %c0_11] : memref<208x128xf32, #tpu.memory_space<vmem>>, vector<208x128xf32>
      %c0_12 = arith.constant 0 : index
      %c0_13 = arith.constant 0 : index
      %13 = vector.load %arg5[%c0_12, %c0_13] : memref<1x128xf32, #tpu.memory_space<vmem>>, vector<1x128xf32>
      %14 = vector.broadcast %13 : vector<1x128xf32> to vector<208x128xf32>
      %15 = arith.addf %12, %14 : vector<208x128xf32>
      %c0_14 = arith.constant 0 : index
      %c0_15 = arith.constant 0 : index
      %16 = vector.load %arg6[%c0_14, %c0_15] : memref<208x128xf32, #tpu.memory_space<vmem>>, vector<208x128xf32>
      tpu.vector_store %arg6[%c0_14, %c0_15], %15 {strides = array<i32>} : memref<208x128xf32, #tpu.memory_space<vmem>>, vector<208x128xf32>,
    } else {
    }
    return
  }
  func.func @transform_0(%arg0: i32, %arg1: i32, %arg2: i32) -> (i32, i32) {
    %c0_i32 = arith.constant 0 : i32
    return %arg0, %arg2 : i32, i32
  }
  func.func @transform_1(%arg0: i32, %arg1: i32, %arg2: i32) -> (i32, i32) {
    %c0_i32 = arith.constant 0 : i32
    return %arg2, %arg1 : i32, i32
  }
  func.func @transform_2(%arg0: i32, %arg1: i32, %arg2: i32) -> (i32, i32) {
    %c0_i32 = arith.constant 0 : i32
    %c0_i32_0 = arith.constant 0 : i32
    return %c0_i32, %arg1 : i32, i32
  }
  func.func @transform_3(%arg0: i32, %arg1: i32, %arg2: i32) -> (i32, i32) {
    %c0_i32 = arith.constant 0 : i32
    return %arg0, %arg1 : i32, i32
  }
}

</mosaic_0001>

<llo_original>
// kernel: _linear_padded.1
$region0: #{_linear_padded.1}
  #allocation0 [shape = 'u32[]', space=smem, size = 0x4, offset = 0x4, fixed_abs, tag = 'smem constant byte address 0x4 - core index']
  #allocation1 [shape = 'u32[144,128]{1,0:T(1,128)}', space=vmem, size = 0x12000, scoped, tag = 'internal scratch']
  %s0 = inlined_call_operand.vmem [shape: bf16[208,384], index: 0, kind: input, shape index: {}]
  %s1 = inlined_call_operand.vmem [shape: bf16[384,256], index: 1, kind: input, shape index: {}]
  %s2 = inlined_call_operand.vmem [shape: f32[1,256], index: 2, kind: input, shape index: {}]
  %s3 = inlined_call_operand.vmem [shape: f32[208,256], index: 3, kind: output, shape index: {}]
  %s4 = sld [smem:[#allocation0]]
  $region128: #{_linear_padded.1} parent=0
    _
  %s6 = ssub.s32 1, %s4
  %s7 = scalar_select 0, %s6, %s4
  $region1: #{_linear_padded.1} parent=0
    #allocation2 [shape = 'u8[196608]{0}', space=vmem, size = 0x30000, scoped, tag = 'input window, operand 1']
    #allocation3 [shape = 'u8[212992]{0}', space=vmem, size = 0x34000, scoped, tag = 'output window, operand 0']
    loop: start=0, step=1, limit=4
    $region2: #{_linear_padded.1} parent=1 // loop_pre_header
      _
    $region3: #{_linear_padded.1} parent=1 // loop_header
      %s9 = sphi 0, %s13
      %p10 = scmp.ge.s32.totalorder %s9, 4
      %s16 = sphi 0, %s35
      %s17 = sphi 0, %s31
      %s18 = sphi 0, %s27
      %s19 = sphi 0, %s16
      %s20 = sphi 0, %s17
      %s21 = sphi 0, %s18
      %s22 = sphi 0, %s19
      %s23 = sphi 0, %s20
      %s24 = sphi 0, %s21
      %s40 = sphi 0, %s42
      %s43 = sphi 0, %s40
      %s44 = sphi 0, %s43
      %s60 = sphi 0, %s44
      %s68 = sphi 0, %s70
      %s71 = sphi 0, %s68
      %s72 = sphi 0, %s71
      %s88 = sphi 0, %s72
      %s94 = sphi 0, %s96
      %s97 = sphi 0, %s94
      %s98 = sphi 0, %s97
      %s114 = sphi 0, %s98
      %s122 = sphi 0, %s124
      %s125 = sphi 0, %s122
      %s126 = sphi 0, %s125
      %s142 = sphi 0, %s126
    $region4: #{_linear_padded.1} parent=1 // loop_header_branch
      %12 = sbr.rel (%p10) target = $region8
    $region5: #{_linear_padded.1} parent=1 // loop_body
      %s14 = ssub.s32 %s9, 1
      %s15 = ssub.s32 %s9, 2
      %s25 = sadd.s32 1, %s18
      %p26 = scmp.ge.s32.totalorder %s25, 1
      %s27 = scalar_select %p26, 0, %s25
      %s28 = sadd.s32 1, %s17
      %s29 = scalar_select %p26, %s28, %s17
      %p30 = scmp.ge.s32.totalorder %s29, 2
      %s31 = scalar_select %p30, 0, %s29
      %s32 = sadd.s32 1, %s16
      %s33 = scalar_select %p30, %s32, %s16
      %p34 = scmp.ge.s32.totalorder %s33, 1
      %s35 = scalar_select %p34, 0, %s33
      %s36 = ssub.s32 %s16, %s35
      %s37 = ssub.s32 %s18, %s27
      %s38 = sor.u32 %s36, %s37
      %p39 = scmp.eq.s32.totalorder %s38, 0
      %s41 = sadd.s32 %s40, 1
      %s42 = scalar_select %p39, %s40, %s41
      %p45 = pneg %p39
      %p46 = scmp.eq.s32.totalorder %s9, 1
      %p47 = por %p45, %p46
      %p48 = scmp.ne.s32.totalorder %s40, %s43
      %p49 = scmp.eq.s32.totalorder %s9, 0
      %p50 = por %p48, %p49
      %p51 = scmp.ne.s32.totalorder %s40, %s43
      %p52 = scmp.eq.s32.totalorder %s14, 1
      %p53 = por %p51, %p52
      %p54 = scmp.ne.s32.totalorder %s43, %s44
      %p55 = scmp.eq.s32.totalorder %s14, 0
      %p56 = por %p54, %p55
      %p57 = scmp.ne.s32.totalorder %s43, %s44
      %p58 = scmp.eq.s32.totalorder %s15, 1
      %p59 = por %p57, %p58
      %p61 = scmp.ne.s32.totalorder %s44, %s60
      %p62 = scmp.eq.s32.totalorder %s15, 0
      %p63 = por %p61, %p62
      %s64 = ssub.s32 %s18, %s27
      %s65 = ssub.s32 %s17, %s31
      %s66 = sor.u32 %s64, %s65
      %p67 = scmp.eq.s32.totalorder %s66, 0
      %s69 = sadd.s32 %s68, 1
      %s70 = scalar_select %p67, %s68, %s69
      %p73 = pneg %p67
      %p74 = scmp.eq.s32.totalorder %s9, 1
      %p75 = por %p73, %p74
      %p76 = scmp.ne.s32.totalorder %s68, %s71
      %p77 = scmp.eq.s32.totalorder %s9, 0
      %p78 = por %p76, %p77
      %p79 = scmp.ne.s32.totalorder %s68, %s71
      %p80 = scmp.eq.s32.totalorder %s14, 1
      %p81 = por %p79, %p80
      %p82 = scmp.ne.s32.totalorder %s71, %s72
      %p83 = scmp.eq.s32.totalorder %s14, 0
      %p84 = por %p82, %p83
      %p85 = scmp.ne.s32.totalorder %s71, %s72
      %p86 = scmp.eq.s32.totalorder %s15, 1
      %p87 = por %p85, %p86
      %p89 = scmp.ne.s32.totalorder %s72, %s88
      %p90 = scmp.eq.s32.totalorder %s15, 0
      %p91 = por %p89, %p90
      %s92 = ssub.s32 %s17, %s31
      %p93 = scmp.eq.s32.totalorder %s92, 0
      %s95 = sadd.s32 %s94, 1
      %s96 = scalar_select %p93, %s94, %s95
      %p99 = pneg %p93
      %p100 = scmp.eq.s32.totalorder %s9, 1
      %p101 = por %p99, %p100
      %p102 = scmp.ne.s32.totalorder %s94, %s97
      %p103 = scmp.eq.s32.totalorder %s9, 0
      %p104 = por %p102, %p103
      %p105 = scmp.ne.s32.totalorder %s94, %s97
      %p106 = scmp.eq.s32.totalorder %s14, 1
      %p107 = por %p105, %p106
      %p108 = scmp.ne.s32.totalorder %s97, %s98
      %p109 = scmp.eq.s32.totalorder %s14, 0
      %p110 = por %p108, %p109
      %p111 = scmp.ne.s32.totalorder %s97, %s98
      %p112 = scmp.eq.s32.totalorder %s15, 1
      %p113 = por %p111, %p112
      %p115 = scmp.ne.s32.totalorder %s98, %s114
      %p116 = scmp.eq.s32.totalorder %s15, 0
      %p117 = por %p115, %p116
      %s118 = ssub.s32 %s16, %s35
      %s119 = ssub.s32 %s17, %s31
      %s120 = sor.u32 %s118, %s119
      %p121 = scmp.eq.s32.totalorder %s120, 0
      %s123 = sadd.s32 %s122, 1
      %s124 = scalar_select %p121, %s122, %s123
      %p127 = pneg %p121
      %p128 = scmp.eq.s32.totalorder %s9, 1
      %p129 = por %p127, %p128
      %p130 = scmp.ne.s32.totalorder %s122, %s125
      %p131 = scmp.eq.s32.totalorder %s9, 0
      %p132 = por %p130, %p131
      %p133 = scmp.ne.s32.totalorder %s122, %s125
      %p134 = scmp.eq.s32.totalorder %s14, 1
      %p135 = por %p133, %p134
      %p136 = scmp.ne.s32.totalorder %s125, %s126
      %p137 = scmp.eq.s32.totalorder %s14, 0
      %p138 = por %p136, %p137
      %p139 = scmp.ne.s32.totalorder %s125, %s126
      %p140 = scmp.eq.s32.totalorder %s15, 1
      %p141 = por %p139, %p140
      %p143 = scmp.ne.s32.totalorder %s126, %s142
      %p144 = scmp.eq.s32.totalorder %s15, 0
      %p145 = por %p143, %p144
      %p146 = scmp.le.s32.totalorder 1, %s9
      %p147 = scmp.lt.s32.totalorder %s9, 3
      %p148 = pnand %p146, %p147
      %p149 = pneg %p148
      // Predicated region
      $region9: #{_linear_padded.1} parent=5 // pred_check
        _
      $region10: #{_linear_padded.1} parent=5 // pred_check_branch
        %151 = sbr.rel (%p148) target = $region12
      $region11: #{_linear_padded.1} parent=5 // pred_region
        %s152 = ssub.s32 %s9, 1
        // Predicated region
        $region13: #{_linear_padded.1} parent=11 // pred_check
          %p153 = pneg %p56
        $region14: #{_linear_padded.1} parent=11 // pred_check_branch
          %155 = sbr.rel (%p153) target = $region16
        $region15: #{_linear_padded.1} parent=11 // pred_region
          %s156 = smul.u32 26, %s19
          %s157 = smul.u32 3, %s21
          %p158 = scmp.lt.s32.totalorder %s156, 25
          %s159 = scalar_select %p158, %s156, 25
          %p160 = scmp.lt.s32.totalorder %s157, 2
          %s161 = scalar_select %p160, %s157, 2
          %s162 = smul.addr %s159, 3
          %s163 = sadd.s32 %s161, %s162
          %s164 = smul.addr %s163, 4
          %s165 = scalar_lea.vmem %s0, %s164
          %s166 = smul.u32 26, %s19
          %s167 = smul.u32 3, %s21
        $region16: #{_linear_padded.1} parent=11 // pred_fallthru
          _
      $region12: #{_linear_padded.1} parent=5 // pred_fallthru
        _
      %p168 = scmp.lt.s32.totalorder %s9, 2
      // Predicated region
      $region17: #{_linear_padded.1} parent=5 // pred_check
        %p169 = pneg %p168
      $region18: #{_linear_padded.1} parent=5 // pred_check_branch
        %171 = sbr.rel (%p169) target = $region20
      $region19: #{_linear_padded.1} parent=5 // pred_region
        // Predicated region
        $region21: #{_linear_padded.1} parent=19 // pred_check
          %p172 = pneg %p78
        $region22: #{_linear_padded.1} parent=19 // pred_check_branch
          %174 = sbr.rel (%p172) target = $region24
        $region23: #{_linear_padded.1} parent=19 // pred_region
          %s175 = sand.u32 %s68, 1
          %s176 = sand.u32 %s68, 1
          %s177 = smul.addr %s176, 192
          %s178 = scalar_lea.vmem [#allocation2], %s177
          %s179 = smul.u32 48, %s18
          %s180 = smul.addr %s179, 2
          %s181 = sadd.s32 %s17, %s180
          %s182 = smul.addr %s181, 4
          %s183 = scalar_lea.vmem %s1, %s182
          // Predicated region
          $region25: #{_linear_padded.1} parent=23 // pred_check
            _
          $region26: #{_linear_padded.1} parent=23 // pred_check_branch
            %185 = sbr.rel (0) target = $region28
          $region27: #{_linear_padded.1} parent=23 // pred_region
            // Predicated region
            $region29: #{_linear_padded.1} parent=27 // pred_check
              _
            $region30: #{_linear_padded.1} parent=27 // pred_check_branch
              %187 = sbr.rel target = $region32
            $region31: #{_linear_padded.1} parent=27 // pred_region
              // Predicated region
              $region44: #{_linear_padded.1} parent=31 // pred_check
                _
              $region45: #{_linear_padded.1} parent=31 // pred_check_branch
                %296 = sbr.rel (0) target = $region47
              $region46: #{_linear_padded.1} parent=31 // pred_region
                loop: start=0, step=1, limit=1
                $region48: #{_linear_padded.1} parent=46 // loop_pre_header
                  _
                $region49: #{_linear_padded.1} parent=46 // loop_header
                  %s298 = sphi 0, %s302
                  %p299 = scmp.ge.s32.totalorder %s298, 1
                  %s303 = sphi %s183, %s183
                  %s304 = sphi %s178, %s178
                $region50: #{_linear_padded.1} parent=46 // loop_header_branch
                  %301 = sbr.rel (%p299) target = $region54
                $region51: #{_linear_padded.1} parent=46 // loop_body
                  _
                $region52: #{_linear_padded.1} parent=46 // loop_footer
                  %s302 = sadd.s32 1, %s298
                $region53: #{_linear_padded.1} parent=46 // loop_footer_branch
                  %297 = sbr.rel target = $region49
                $region54: #{_linear_padded.1} parent=46 // loop_exit
                  _
                loop: start=0, step=1, limit=1
                $region55: #{_linear_padded.1} parent=46 // loop_pre_header
                  _
                $region56: #{_linear_padded.1} parent=46 // loop_header
                  %s307 = sphi 0, %s311
                  %p308 = scmp.ge.s32.totalorder %s307, 1
                  %s312 = sphi %s183, %s183
                  %s313 = sphi %s178, %s178
                $region57: #{_linear_padded.1} parent=46 // loop_header_branch
                  %310 = sbr.rel (%p308) target = $region61
                $region58: #{_linear_padded.1} parent=46 // loop_body
                  %v314 = vld [vmem:[%s312] sm:$0xf]
                  %315 = vst [vmem:[%s313] sm:$0xf] %v314
                  %v316 = vld [vmem:[%s312 + $0x8] sm:$0xf]
                  %317 = vst [vmem:[%s313 + $0x4] sm:$0xf] %v316
                  %v318 = vld [vmem:[%s312 + $0x10] sm:$0xf]
                  %319 = vst [vmem:[%s313 + $0x8] sm:$0xf] %v318
                  %v320 = vld [vmem:[%s312 + $0x18] sm:$0xf]
                  %321 = vst [vmem:[%s313 + $0xc] sm:$0xf] %v320
                  %v322 = vld [vmem:[%s312 + $0x20] sm:$0xf]
                  %323 = vst [vmem:[%s313 + $0x10] sm:$0xf] %v322
                  %v324 = vld [vmem:[%s312 + $0x28] sm:$0xf]
                  %325 = vst [vmem:[%s313 + $0x14] sm:$0xf] %v324
                  %v326 = vld [vmem:[%s312 + $0x30] sm:$0xf]
                  %327 = vst [vmem:[%s313 + $0x18] sm:$0xf] %v326
                  %v328 = vld [vmem:[%s312 + $0x38] sm:$0xf]
                  %329 = vst [vmem:[%s313 + $0x1c] sm:$0xf] %v328
                  %v330 = vld [vmem:[%s312 + $0x40] sm:$0xf]
                  %331 = vst [vmem:[%s313 + $0x20] sm:$0xf] %v330
                  %v332 = vld [vmem:[%s312 + $0x48] sm:$0xf]
                  %333 = vst [vmem:[%s313 + $0x24] sm:$0xf] %v332
                  %v334 = vld [vmem:[%s312 + $0x50] sm:$0xf]
                  %335 = vst [vmem:[%s313 + $0x28] sm:$0xf] %v334
                  %v336 = vld [vmem:[%s312 + $0x58] sm:$0xf]
                  %337 = vst [vmem:[%s313 + $0x2c] sm:$0xf] %v336
                  %v338 = vld [vmem:[%s312 + $0x60] sm:$0xf]
                  %339 = vst [vmem:[%s313 + $0x30] sm:$0xf] %v338
                  %v340 = vld [vmem:[%s312 + $0x68] sm:$0xf]
                  %341 = vst [vmem:[%s313 + $0x34] sm:$0xf] %v340
                  %v342 = vld [vmem:[%s312 + $0x70] sm:$0xf]
                  %343 = vst [vmem:[%s313 + $0x38] sm:$0xf] %v342
                  %v344 = vld [vmem:[%s312 + $0x78] sm:$0xf]
                  %345 = vst [vmem:[%s313 + $0x3c] sm:$0xf] %v344
                  %v346 = vld [vmem:[%s312 + $0x80] sm:$0xf]
                  %347 = vst [vmem:[%s313 + $0x40] sm:$0xf] %v346
                  %v348 = vld [vmem:[%s312 + $0x88] sm:$0xf]
                  %349 = vst [vmem:[%s313 + $0x44] sm:$0xf] %v348
                  %v350 = vld [vmem:[%s312 + $0x90] sm:$0xf]
                  %351 = vst [vmem:[%s313 + $0x48] sm:$0xf] %v350
                  %v352 = vld [vmem:[%s312 + $0x98] sm:$0xf]
                  %353 = vst [vmem:[%s313 + $0x4c] sm:$0xf] %v352
                  %v354 = vld [vmem:[%s312 + $0xa0] sm:$0xf]
                  %355 = vst [vmem:[%s313 + $0x50] sm:$0xf] %v354
                  %v356 = vld [vmem:[%s312 + $0xa8] sm:$0xf]
                  %357 = vst [vmem:[%s313 + $0x54] sm:$0xf] %v356
                  %v358 = vld [vmem:[%s312 + $0xb0] sm:$0xf]
                  %359 = vst [vmem:[%s313 + $0x58] sm:$0xf] %v358
                  %v360 = vld [vmem:[%s312 + $0xb8] sm:$0xf]
                  %361 = vst [vmem:[%s313 + $0x5c] sm:$0xf] %v360
                  %v362 = vld [vmem:[%s312 + $0xc0] sm:$0xf]
                  %363 = vst [vmem:[%s313 + $0x60] sm:$0xf] %v362
                  %v364 = vld [vmem:[%s312 + $0xc8] sm:$0xf]
                  %365 = vst [vmem:[%s313 + $0x64] sm:$0xf] %v364
                  %v366 = vld [vmem:[%s312 + $0xd0] sm:$0xf]
                  %367 = vst [vmem:[%s313 + $0x68] sm:$0xf] %v366
                  %v368 = vld [vmem:[%s312 + $0xd8] sm:$0xf]
                  %369 = vst [vmem:[%s313 + $0x6c] sm:$0xf] %v368
                  %v370 = vld [vmem:[%s312 + $0xe0] sm:$0xf]
                  %371 = vst [vmem:[%s313 + $0x70] sm:$0xf] %v370
                  %v372 = vld [vmem:[%s312 + $0xe8] sm:$0xf]
                  %373 = vst [vmem:[%s313 + $0x74] sm:$0xf] %v372
                  %v374 = vld [vmem:[%s312 + $0xf0] sm:$0xf]
                  %375 = vst [vmem:[%s313 + $0x78] sm:$0xf] %v374
                  %v376 = vld [vmem:[%s312 + $0xf8] sm:$0xf]
                  %377 = vst [vmem:[%s313 + $0x7c] sm:$0xf] %v376
                  %v378 = vld [vmem:[%s312 + $0x100] sm:$0xf]
                  %379 = vst [vmem:[%s313 + $0x80] sm:$0xf] %v378
                  %v380 = vld [vmem:[%s312 + $0x108] sm:$0xf]
                  %381 = vst [vmem:[%s313 + $0x84] sm:$0xf] %v380
                  %v382 = vld [vmem:[%s312 + $0x110] sm:$0xf]
                  %383 = vst [vmem:[%s313 + $0x88] sm:$0xf] %v382
                  %v384 = vld [vmem:[%s312 + $0x118] sm:$0xf]
                  %385 = vst [vmem:[%s313 + $0x8c] sm:$0xf] %v384
                  %v386 = vld [vmem:[%s312 + $0x120] sm:$0xf]
                  %387 = vst [vmem:[%s313 + $0x90] sm:$0xf] %v386
                  %v388 = vld [vmem:[%s312 + $0x128] sm:$0xf]
                  %389 = vst [vmem:[%s313 + $0x94] sm:$0xf] %v388
                  %v390 = vld [vmem:[%s312 + $0x130] sm:$0xf]
                  %391 = vst [vmem:[%s313 + $0x98] sm:$0xf] %v390
                  %v392 = vld [vmem:[%s312 + $0x138] sm:$0xf]
                  %393 = vst [vmem:[%s313 + $0x9c] sm:$0xf] %v392
                  %v394 = vld [vmem:[%s312 + $0x140] sm:$0xf]
                  %395 = vst [vmem:[%s313 + $0xa0] sm:$0xf] %v394
                  %v396 = vld [vmem:[%s312 + $0x148] sm:$0xf]
                  %397 = vst [vmem:[%s313 + $0xa4] sm:$0xf] %v396
                  %v398 = vld [vmem:[%s312 + $0x150] sm:$0xf]
                  %399 = vst [vmem:[%s313 + $0xa8] sm:$0xf] %v398
                  %v400 = vld [vmem:[%s312 + $0x158] sm:$0xf]
                  %401 = vst [vmem:[%s313 + $0xac] sm:$0xf] %v400
                  %v402 = vld [vmem:[%s312 + $0x160] sm:$0xf]
                  %403 = vst [vmem:[%s313 + $0xb0] sm:$0xf] %v402
                  %v404 = vld [vmem:[%s312 + $0x168] sm:$0xf]
                  %405 = vst [vmem:[%s313 + $0xb4] sm:$0xf] %v404
                  %v406 = vld [vmem:[%s312 + $0x170] sm:$0xf]
                  %407 = vst [vmem:[%s313 + $0xb8] sm:$0xf] %v406
                  %v408 = vld [vmem:[%s312 + $0x178] sm:$0xf]
                  %409 = vst [vmem:[%s313 + $0xbc] sm:$0xf] %v408
                $region59: #{_linear_padded.1} parent=46 // loop_footer
                  %s311 = sadd.s32 1, %s307
                $region60: #{_linear_padded.1} parent=46 // loop_footer_branch
                  %306 = sbr.rel target = $region56
                $region61: #{_linear_padded.1} parent=46 // loop_exit
                  _
              $region47: #{_linear_padded.1} parent=31 // pred_fallthru
                _
            $region32: #{_linear_padded.1} parent=27 // pred_fallthru
              _
            // Predicated region
            $region33: #{_linear_padded.1} parent=27 // pred_check
              _
            $region34: #{_linear_padded.1} parent=27 // pred_check_branch
              %189 = sbr.rel (0) target = $region36
            $region35: #{_linear_padded.1} parent=27 // pred_region
              loop: start=0, step=1, limit=1
              $region37: #{_linear_padded.1} parent=35 // loop_pre_header
                _
              $region38: #{_linear_padded.1} parent=35 // loop_header
                %s192 = sphi 0, %s196
                %p193 = scmp.ge.s32.totalorder %s192, 1
                %s197 = sphi %s183, %s183
                %s198 = sphi %s178, %s178
              $region39: #{_linear_padded.1} parent=35 // loop_header_branch
                %195 = sbr.rel (%p193) target = $region43
              $region40: #{_linear_padded.1} parent=35 // loop_body
                %v199 = vld [vmem:[%s197] sm:$0xf]
                %200 = vst [vmem:[%s198] sm:$0xf] %v199
                %v201 = vld [vmem:[%s197 + $0x8] sm:$0xf]
                %202 = vst [vmem:[%s198 + $0x4] sm:$0xf] %v201
                %v203 = vld [vmem:[%s197 + $0x10] sm:$0xf]
                %204 = vst [vmem:[%s198 + $0x8] sm:$0xf] %v203
                %v205 = vld [vmem:[%s197 + $0x18] sm:$0xf]
                %206 = vst [vmem:[%s198 + $0xc] sm:$0xf] %v205
                %v207 = vld [vmem:[%s197 + $0x20] sm:$0xf]
                %208 = vst [vmem:[%s198 + $0x10] sm:$0xf] %v207
                %v209 = vld [vmem:[%s197 + $0x28] sm:$0xf]
                %210 = vst [vmem:[%s198 + $0x14] sm:$0xf] %v209
                %v211 = vld [vmem:[%s197 + $0x30] sm:$0xf]
                %212 = vst [vmem:[%s198 + $0x18] sm:$0xf] %v211
                %v213 = vld [vmem:[%s197 + $0x38] sm:$0xf]
                %214 = vst [vmem:[%s198 + $0x1c] sm:$0xf] %v213
                %v215 = vld [vmem:[%s197 + $0x40] sm:$0xf]
                %216 = vst [vmem:[%s198 + $0x20] sm:$0xf] %v215
                %v217 = vld [vmem:[%s197 + $0x48] sm:$0xf]
                %218 = vst [vmem:[%s198 + $0x24] sm:$0xf] %v217
                %v219 = vld [vmem:[%s197 + $0x50] sm:$0xf]
                %220 = vst [vmem:[%s198 + $0x28] sm:$0xf] %v219
                %v221 = vld [vmem:[%s197 + $0x58] sm:$0xf]
                %222 = vst [vmem:[%s198 + $0x2c] sm:$0xf] %v221
                %v223 = vld [vmem:[%s197 + $0x60] sm:$0xf]
                %224 = vst [vmem:[%s198 + $0x30] sm:$0xf] %v223
                %v225 = vld [vmem:[%s197 + $0x68] sm:$0xf]
                %226 = vst [vmem:[%s198 + $0x34] sm:$0xf] %v225
                %v227 = vld [vmem:[%s197 + $0x70] sm:$0xf]
                %228 = vst [vmem:[%s198 + $0x38] sm:$0xf] %v227
                %v229 = vld [vmem:[%s197 + $0x78] sm:$0xf]
                %230 = vst [vmem:[%s198 + $0x3c] sm:$0xf] %v229
                %v231 = vld [vmem:[%s197 + $0x80] sm:$0xf]
                %232 = vst [vmem:[%s198 + $0x40] sm:$0xf] %v231
                %v233 = vld [vmem:[%s197 + $0x88] sm:$0xf]
                %234 = vst [vmem:[%s198 + $0x44] sm:$0xf] %v233
                %v235 = vld [vmem:[%s197 + $0x90] sm:$0xf]
                %236 = vst [vmem:[%s198 + $0x48] sm:$0xf] %v235
                %v237 = vld [vmem:[%s197 + $0x98] sm:$0xf]
                %238 = vst [vmem:[%s198 + $0x4c] sm:$0xf] %v237
                %v239 = vld [vmem:[%s197 + $0xa0] sm:$0xf]
                %240 = vst [vmem:[%s198 + $0x50] sm:$0xf] %v239
                %v241 = vld [vmem:[%s197 + $0xa8] sm:$0xf]
                %242 = vst [vmem:[%s198 + $0x54] sm:$0xf] %v241
                %v243 = vld [vmem:[%s197 + $0xb0] sm:$0xf]
                %244 = vst [vmem:[%s198 + $0x58] sm:$0xf] %v243
                %v245 = vld [vmem:[%s197 + $0xb8] sm:$0xf]
                %246 = vst [vmem:[%s198 + $0x5c] sm:$0xf] %v245
                %v247 = vld [vmem:[%s197 + $0xc0] sm:$0xf]
                %248 = vst [vmem:[%s198 + $0x60] sm:$0xf] %v247
                %v249 = vld [vmem:[%s197 + $0xc8] sm:$0xf]
                %250 = vst [vmem:[%s198 + $0x64] sm:$0xf] %v249
                %v251 = vld [vmem:[%s197 + $0xd0] sm:$0xf]
                %252 = vst [vmem:[%s198 + $0x68] sm:$0xf] %v251
                %v253 = vld [vmem:[%s197 + $0xd8] sm:$0xf]
                %254 = vst [vmem:[%s198 + $0x6c] sm:$0xf] %v253
                %v255 = vld [vmem:[%s197 + $0xe0] sm:$0xf]
                %256 = vst [vmem:[%s198 + $0x70] sm:$0xf] %v255
                %v257 = vld [vmem:[%s197 + $0xe8] sm:$0xf]
                %258 = vst [vmem:[%s198 + $0x74] sm:$0xf] %v257
                %v259 = vld [vmem:[%s197 + $0xf0] sm:$0xf]
                %260 = vst [vmem:[%s198 + $0x78] sm:$0xf] %v259
                %v261 = vld [vmem:[%s197 + $0xf8] sm:$0xf]
                %262 = vst [vmem:[%s198 + $0x7c] sm:$0xf] %v261
                %v263 = vld [vmem:[%s197 + $0x100] sm:$0xf]
                %264 = vst [vmem:[%s198 + $0x80] sm:$0xf] %v263
                %v265 = vld [vmem:[%s197 + $0x108] sm:$0xf]
                %266 = vst [vmem:[%s198 + $0x84] sm:$0xf] %v265
                %v267 = vld [vmem:[%s197 + $0x110] sm:$0xf]
                %268 = vst [vmem:[%s198 + $0x88] sm:$0xf] %v267
                %v269 = vld [vmem:[%s197 + $0x118] sm:$0xf]
                %270 = vst [vmem:[%s198 + $0x8c] sm:$0xf] %v269
                %v271 = vld [vmem:[%s197 + $0x120] sm:$0xf]
                %272 = vst [vmem:[%s198 + $0x90] sm:$0xf] %v271
                %v273 = vld [vmem:[%s197 + $0x128] sm:$0xf]
                %274 = vst [vmem:[%s198 + $0x94] sm:$0xf] %v273
                %v275 = vld [vmem:[%s197 + $0x130] sm:$0xf]
                %276 = vst [vmem:[%s198 + $0x98] sm:$0xf] %v275
                %v277 = vld [vmem:[%s197 + $0x138] sm:$0xf]
                %278 = vst [vmem:[%s198 + $0x9c] sm:$0xf] %v277
                %v279 = vld [vmem:[%s197 + $0x140] sm:$0xf]
                %280 = vst [vmem:[%s198 + $0xa0] sm:$0xf] %v279
                %v281 = vld [vmem:[%s197 + $0x148] sm:$0xf]
                %282 = vst [vmem:[%s198 + $0xa4] sm:$0xf] %v281
                %v283 = vld [vmem:[%s197 + $0x150] sm:$0xf]
                %284 = vst [vmem:[%s198 + $0xa8] sm:$0xf] %v283
                %v285 = vld [vmem:[%s197 + $0x158] sm:$0xf]
                %286 = vst [vmem:[%s198 + $0xac] sm:$0xf] %v285
                %v287 = vld [vmem:[%s197 + $0x160] sm:$0xf]
                %288 = vst [vmem:[%s198 + $0xb0] sm:$0xf] %v287
                %v289 = vld [vmem:[%s197 + $0x168] sm:$0xf]
                %290 = vst [vmem:[%s198 + $0xb4] sm:$0xf] %v289
                %v291 = vld [vmem:[%s197 + $0x170] sm:$0xf]
                %292 = vst [vmem:[%s198 + $0xb8] sm:$0xf] %v291
                %v293 = vld [vmem:[%s197 + $0x178] sm:$0xf]
                %294 = vst [vmem:[%s198 + $0xbc] sm:$0xf] %v293
              $region41: #{_linear_padded.1} parent=35 // loop_footer
                %s196 = sadd.s32 1, %s192
              $region42: #{_linear_padded.1} parent=35 // loop_footer_branch
                %191 = sbr.rel target = $region38
              $region43: #{_linear_padded.1} parent=35 // loop_exit
                _
            $region36: #{_linear_padded.1} parent=27 // pred_fallthru
              _
          $region28: #{_linear_padded.1} parent=23 // pred_fallthru
            _
          %410 = vnop
        $region24: #{_linear_padded.1} parent=19 // pred_fallthru
          _
        // Predicated region
        $region62: #{_linear_padded.1} parent=19 // pred_check
          %p411 = pneg %p104
        $region63: #{_linear_padded.1} parent=19 // pred_check_branch
          %413 = sbr.rel (%p411) target = $region65
        $region64: #{_linear_padded.1} parent=19 // pred_region
          %p414 = scmp.lt.s32.totalorder %s17, 1
          %s415 = scalar_select %p414, %s17, 1
          %s416 = scalar_lea.vmem %s2, %s415
        $region65: #{_linear_padded.1} parent=19 // pred_fallthru
          _
      $region20: #{_linear_padded.1} parent=5 // pred_fallthru
        _
      %p417 = scmp.le.s32.totalorder 1, %s9
      %p418 = scmp.lt.s32.totalorder %s9, 3
      %p419 = pnand %p417, %p418
      %p420 = pneg %p419
      // Predicated region
      $region66: #{_linear_padded.1} parent=5 // pred_check
        _
      $region67: #{_linear_padded.1} parent=5 // pred_check_branch
        %422 = sbr.rel (%p419) target = $region69
      $region68: #{_linear_padded.1} parent=5 // pred_region
        %s423 = ssub.s32 %s9, 1
        %s424 = sand.u32 %s71, 1
        %s425 = sand.u32 %s71, 1
        %s426 = smul.addr %s425, 192
        %s427 = scalar_lea.vmem [#allocation2], %s426
        // Predicated region
        $region70: #{_linear_padded.1} parent=68 // pred_check
          %p428 = pneg %p84
        $region71: #{_linear_padded.1} parent=68 // pred_check_branch
          %430 = sbr.rel (%p428) target = $region73
        $region72: #{_linear_padded.1} parent=68 // pred_region
          _
        $region73: #{_linear_padded.1} parent=68 // pred_fallthru
          _
        %s431 = smul.u32 26, %s19
        %s432 = smul.u32 3, %s21
        %p433 = scmp.lt.s32.totalorder %s431, 25
        %s434 = scalar_select %p433, %s431, 25
        %p435 = scmp.lt.s32.totalorder %s432, 2
        %s436 = scalar_select %p435, %s432, 2
        %s437 = smul.addr %s434, 3
        %s438 = sadd.s32 %s436, %s437
        %s439 = smul.addr %s438, 4
        %s440 = scalar_lea.vmem %s0, %s439
        %p441 = pneg %p56
        %p442 = pneg %p53
        %s443 = sand.u32 %s71, 1
        %s444 = sand.u32 %s71, 1
        %s445 = smul.addr %s444, 192
        %s446 = scalar_lea.vmem [#allocation2], %s445
        %p447 = pneg %p84
        %p448 = pneg %p81
        %p449 = scmp.lt.s32.totalorder %s20, 1
        %s450 = scalar_select %p449, %s20, 1
        %s451 = scalar_lea.vmem %s2, %s450
        %p452 = pneg %p110
        %p453 = pneg %p107
        %p454 = pneg %p138
        %p455 = pneg %p135
        %s456 = sand.u32 %s125, 1
        %s457 = sand.u32 %s125, 1
        %s458 = smul.addr %s457, 208
        %s459 = scalar_lea.vmem [#allocation3], %s458
        %s460 = smul.u32 26, %s19
        %s461 = smul.u32 3, %s21
        %p462 = scmp.lt.s32.totalorder %s460, 25
        %s463 = scalar_select %p462, %s460, 25
        %p464 = scmp.lt.s32.totalorder %s461, 2
        %s465 = scalar_select %p464, %s461, 2
        %s466 = smul.addr %s463, 3
        %s467 = sadd.s32 %s465, %s466
        %s468 = smul.addr %s467, 4
        %s469 = scalar_lea.vmem %s0, %s468
        %s470 = smul.u32 26, %s19
        %s471 = smul.u32 3, %s21
        %s472 = smul.u32 48, %s21
        %p473 = scmp.lt.s32.totalorder %s20, 1
        %s474 = scalar_select %p473, %s20, 1
        %s475 = scalar_lea.vmem %s2, %s474
        %s476 = smul.u32 26, %s19
        %p478 = scmp.eq.s32.totalorder %s21, 0
        // Predicated region
        $region74: #{_linear_padded.1} parent=68 // pred_check
          %p479 = pneg %p478
        $region75: #{_linear_padded.1} parent=68 // pred_check_branch
          %481 = sbr.rel (%p479) target = $region77
        $region76: #{_linear_padded.1} parent=68 // pred_region
          %482 = vst [vmem:[%s459] sm:$0xff] 0.0
          %483 = vst [vmem:[%s459 + $0x8] sm:$0xff] 0.0
          %484 = vst [vmem:[%s459 + $0x10] sm:$0xff] 0.0
          %485 = vst [vmem:[%s459 + $0x18] sm:$0xff] 0.0
          %486 = vst [vmem:[%s459 + $0x20] sm:$0xff] 0.0
          %487 = vst [vmem:[%s459 + $0x28] sm:$0xff] 0.0
          %488 = vst [vmem:[%s459 + $0x30] sm:$0xff] 0.0
          %489 = vst [vmem:[%s459 + $0x38] sm:$0xff] 0.0
          %490 = vst [vmem:[%s459 + $0x40] sm:$0xff] 0.0
          %491 = vst [vmem:[%s459 + $0x48] sm:$0xff] 0.0
          %492 = vst [vmem:[%s459 + $0x50] sm:$0xff] 0.0
          %493 = vst [vmem:[%s459 + $0x58] sm:$0xff] 0.0
          %494 = vst [vmem:[%s459 + $0x60] sm:$0xff] 0.0
          %495 = vst [vmem:[%s459 + $0x68] sm:$0xff] 0.0
          %496 = vst [vmem:[%s459 + $0x70] sm:$0xff] 0.0
          %497 = vst [vmem:[%s459 + $0x78] sm:$0xff] 0.0
          %498 = vst [vmem:[%s459 + $0x80] sm:$0xff] 0.0
          %499 = vst [vmem:[%s459 + $0x88] sm:$0xff] 0.0
          %500 = vst [vmem:[%s459 + $0x90] sm:$0xff] 0.0
          %501 = vst [vmem:[%s459 + $0x98] sm:$0xff] 0.0
          %502 = vst [vmem:[%s459 + $0xa0] sm:$0xff] 0.0
          %503 = vst [vmem:[%s459 + $0xa8] sm:$0xff] 0.0
          %504 = vst [vmem:[%s459 + $0xb0] sm:$0xff] 0.0
          %505 = vst [vmem:[%s459 + $0xb8] sm:$0xff] 0.0
          %506 = vst [vmem:[%s459 + $0xc0] sm:$0xff] 0.0
          %507 = vst [vmem:[%s459 + $0xc8] sm:$0xff] 0.0
        $region77: #{_linear_padded.1} parent=68 // pred_fallthru
          _
        %v508 = vld [vmem:[%s459] sm:$0xff]
        %v509 = vld [vmem:[%s459 + $0x8] sm:$0xff]
        %v510 = vld [vmem:[%s459 + $0x10] sm:$0xff]
        %v511 = vld [vmem:[%s459 + $0x18] sm:$0xff]
        %v512 = vld [vmem:[%s459 + $0x20] sm:$0xff]
        %v513 = vld [vmem:[%s459 + $0x28] sm:$0xff]
        %v514 = vld [vmem:[%s459 + $0x30] sm:$0xff]
        %v515 = vld [vmem:[%s459 + $0x38] sm:$0xff]
        %v516 = vld [vmem:[%s459 + $0x40] sm:$0xff]
        %v517 = vld [vmem:[%s459 + $0x48] sm:$0xff]
        %v518 = vld [vmem:[%s459 + $0x50] sm:$0xff]
        %v519 = vld [vmem:[%s459 + $0x58] sm:$0xff]
        %v520 = vld [vmem:[%s459 + $0x60] sm:$0xff]
        %v521 = vld [vmem:[%s459 + $0x68] sm:$0xff]
        %v522 = vld [vmem:[%s459 + $0x70] sm:$0xff]
        %v523 = vld [vmem:[%s459 + $0x78] sm:$0xff]
        %v524 = vld [vmem:[%s459 + $0x80] sm:$0xff]
        %v525 = vld [vmem:[%s459 + $0x88] sm:$0xff]
        %v526 = vld [vmem:[%s459 + $0x90] sm:$0xff]
        %v527 = vld [vmem:[%s459 + $0x98] sm:$0xff]
        %v528 = vld [vmem:[%s459 + $0xa0] sm:$0xff]
        %v529 = vld [vmem:[%s459 + $0xa8] sm:$0xff]
        %v530 = vld [vmem:[%s459 + $0xb0] sm:$0xff]
        %v531 = vld [vmem:[%s459 + $0xb8] sm:$0xff]
        %v532 = vld [vmem:[%s459 + $0xc0] sm:$0xff]
        %v533 = vld [vmem:[%s459 + $0xc8] sm:$0xff]
        %v534 = vld [vmem:[%s469] sm:$0xff]
        %v535 = vld [vmem:[%s469 + $0x8] sm:$0xf]
        %v536 = vld [vmem:[%s469 + $0xc] sm:$0xff]
        %v537 = vld [vmem:[%s469 + $0x14] sm:$0xf]
        %v538 = vld [vmem:[%s469 + $0x18] sm:$0xff]
        %v539 = vld [vmem:[%s469 + $0x20] sm:$0xf]
        %v540 = vld [vmem:[%s469 + $0x24] sm:$0xff]
        %v541 = vld [vmem:[%s469 + $0x2c] sm:$0xf]
        %v542 = vld [vmem:[%s469 + $0x30] sm:$0xff]
        %v543 = vld [vmem:[%s469 + $0x38] sm:$0xf]
        %v544 = vld [vmem:[%s469 + $0x3c] sm:$0xff]
        %v545 = vld [vmem:[%s469 + $0x44] sm:$0xf]
        %v546 = vld [vmem:[%s469 + $0x48] sm:$0xff]
        %v547 = vld [vmem:[%s469 + $0x50] sm:$0xf]
        %v548 = vld [vmem:[%s469 + $0x54] sm:$0xff]
        %v549 = vld [vmem:[%s469 + $0x5c] sm:$0xf]
        %v550 = vld [vmem:[%s469 + $0x60] sm:$0xff]
        %v551 = vld [vmem:[%s469 + $0x68] sm:$0xf]
        %v552 = vld [vmem:[%s469 + $0x6c] sm:$0xff]
        %v553 = vld [vmem:[%s469 + $0x74] sm:$0xf]
        %v554 = vld [vmem:[%s469 + $0x78] sm:$0xff]
        %v555 = vld [vmem:[%s469 + $0x80] sm:$0xf]
        %v556 = vld [vmem:[%s469 + $0x84] sm:$0xff]
        %v557 = vld [vmem:[%s469 + $0x8c] sm:$0xf]
        %v558 = vld [vmem:[%s469 + $0x90] sm:$0xff]
        %v559 = vld [vmem:[%s469 + $0x98] sm:$0xf]
        %v560 = vld [vmem:[%s469 + $0x9c] sm:$0xff]
        %v561 = vld [vmem:[%s469 + $0xa4] sm:$0xf]
        %v562 = vld [vmem:[%s469 + $0xa8] sm:$0xff]
        %v563 = vld [vmem:[%s469 + $0xb0] sm:$0xf]
        %v564 = vld [vmem:[%s469 + $0xb4] sm:$0xff]
        %v565 = vld [vmem:[%s469 + $0xbc] sm:$0xf]
        %v566 = vld [vmem:[%s469 + $0xc0] sm:$0xff]
        %v567 = vld [vmem:[%s469 + $0xc8] sm:$0xf]
        %v568 = vld [vmem:[%s469 + $0xcc] sm:$0xff]
        %v569 = vld [vmem:[%s469 + $0xd4] sm:$0xf]
        %v570 = vld [vmem:[%s469 + $0xd8] sm:$0xff]
        %v571 = vld [vmem:[%s469 + $0xe0] sm:$0xf]
        %v572 = vld [vmem:[%s469 + $0xe4] sm:$0xff]
        %v573 = vld [vmem:[%s469 + $0xec] sm:$0xf]
        %v574 = vld [vmem:[%s469 + $0xf0] sm:$0xff]
        %v575 = vld [vmem:[%s469 + $0xf8] sm:$0xf]
        %v576 = vld [vmem:[%s469 + $0xfc] sm:$0xff]
        %v577 = vld [vmem:[%s469 + $0x104] sm:$0xf]
        %v578 = vld [vmem:[%s469 + $0x108] sm:$0xff]
        %v579 = vld [vmem:[%s469 + $0x110] sm:$0xf]
        %v580 = vld [vmem:[%s469 + $0x114] sm:$0xff]
        %v581 = vld [vmem:[%s469 + $0x11c] sm:$0xf]
        %v582 = vld [vmem:[%s469 + $0x120] sm:$0xff]
        %v583 = vld [vmem:[%s469 + $0x128] sm:$0xf]
        %v584 = vld [vmem:[%s469 + $0x12c] sm:$0xff]
        %v585 = vld [vmem:[%s469 + $0x134] sm:$0xf]
        %v586 = vld [vmem:[%s427] sm:$0xf]
        %v587 = vld [vmem:[%s427 + $0x4] sm:$0xf]
        %v588 = vld [vmem:[%s427 + $0x8] sm:$0xf]
        %v589 = vld [vmem:[%s427 + $0xc] sm:$0xf]
        %v590 = vld [vmem:[%s427 + $0x10] sm:$0xf]
        %v591 = vld [vmem:[%s427 + $0x14] sm:$0xf]
        %v592 = vld [vmem:[%s427 + $0x18] sm:$0xf]
        %v593 = vld [vmem:[%s427 + $0x1c] sm:$0xf]
        %v594 = vld [vmem:[%s427 + $0x20] sm:$0xf]
        %v595 = vld [vmem:[%s427 + $0x24] sm:$0xf]
        %v596 = vld [vmem:[%s427 + $0x28] sm:$0xf]
        %v597 = vld [vmem:[%s427 + $0x2c] sm:$0xf]
        %v598 = vld [vmem:[%s427 + $0x30] sm:$0xf]
        %v599 = vld [vmem:[%s427 + $0x34] sm:$0xf]
        %v600 = vld [vmem:[%s427 + $0x38] sm:$0xf]
        %v601 = vld [vmem:[%s427 + $0x3c] sm:$0xf]
        %v602 = vld [vmem:[%s427 + $0x40] sm:$0xf]
        %v603 = vld [vmem:[%s427 + $0x44] sm:$0xf]
        %v604 = vld [vmem:[%s427 + $0x48] sm:$0xf]
        %v605 = vld [vmem:[%s427 + $0x4c] sm:$0xf]
        %v606 = vld [vmem:[%s427 + $0x50] sm:$0xf]
        %v607 = vld [vmem:[%s427 + $0x54] sm:$0xf]
        %v608 = vld [vmem:[%s427 + $0x58] sm:$0xf]
        %v609 = vld [vmem:[%s427 + $0x5c] sm:$0xf]
        %v610 = vld [vmem:[%s427 + $0x60] sm:$0xf]
        %v611 = vld [vmem:[%s427 + $0x64] sm:$0xf]
        %v612 = vld [vmem:[%s427 + $0x68] sm:$0xf]
        %v613 = vld [vmem:[%s427 + $0x6c] sm:$0xf]
        %v614 = vld [vmem:[%s427 + $0x70] sm:$0xf]
        %v615 = vld [vmem:[%s427 + $0x74] sm:$0xf]
        %v616 = vld [vmem:[%s427 + $0x78] sm:$0xf]
        %v617 = vld [vmem:[%s427 + $0x7c] sm:$0xf]
        %v618 = vld [vmem:[%s427 + $0x80] sm:$0xf]
        %v619 = vld [vmem:[%s427 + $0x84] sm:$0xf]
        %v620 = vld [vmem:[%s427 + $0x88] sm:$0xf]
        %v621 = vld [vmem:[%s427 + $0x8c] sm:$0xf]
        %v622 = vld [vmem:[%s427 + $0x90] sm:$0xf]
        %v623 = vld [vmem:[%s427 + $0x94] sm:$0xf]
        %v624 = vld [vmem:[%s427 + $0x98] sm:$0xf]
        %v625 = vld [vmem:[%s427 + $0x9c] sm:$0xf]
        %v626 = vld [vmem:[%s427 + $0xa0] sm:$0xf]
        %v627 = vld [vmem:[%s427 + $0xa4] sm:$0xf]
        %v628 = vld [vmem:[%s427 + $0xa8] sm:$0xf]
        %v629 = vld [vmem:[%s427 + $0xac] sm:$0xf]
        %v630 = vld [vmem:[%s427 + $0xb0] sm:$0xf]
        %v631 = vld [vmem:[%s427 + $0xb4] sm:$0xf]
        %v632 = vld [vmem:[%s427 + $0xb8] sm:$0xf]
        %v633 = vld [vmem:[%s427 + $0xbc] sm:$0xf]
        %v686 = vunpack.c.l.b16 %v534
        %v687 = vunpack.c.h.b16 %v534
        %v688 = vunpack.c.l.b16 %v535
        %v689 = vunpack.c.l.b16 %v536
        %v690 = vunpack.c.h.b16 %v536
        %v691 = vunpack.c.l.b16 %v537
        %v692 = vunpack.c.l.b16 %v538
        %v693 = vunpack.c.h.b16 %v538
        %v694 = vunpack.c.l.b16 %v539
        %v695 = vunpack.c.l.b16 %v540
        %v696 = vunpack.c.h.b16 %v540
        %v697 = vunpack.c.l.b16 %v541
        %v698 = vunpack.c.l.b16 %v542
        %v699 = vunpack.c.h.b16 %v542
        %v700 = vunpack.c.l.b16 %v543
        %v701 = vunpack.c.l.b16 %v544
        %v702 = vunpack.c.h.b16 %v544
        %v703 = vunpack.c.l.b16 %v545
        %v704 = vunpack.c.l.b16 %v546
        %v705 = vunpack.c.h.b16 %v546
        %v706 = vunpack.c.l.b16 %v547
        %v707 = vunpack.c.l.b16 %v548
        %v708 = vunpack.c.h.b16 %v548
        %v709 = vunpack.c.l.b16 %v549
        %v710 = vunpack.c.l.b16 %v550
        %v711 = vunpack.c.h.b16 %v550
        %v712 = vunpack.c.l.b16 %v551
        %v713 = vunpack.c.l.b16 %v552
        %v714 = vunpack.c.h.b16 %v552
        %v715 = vunpack.c.l.b16 %v553
        %v716 = vunpack.c.l.b16 %v554
        %v717 = vunpack.c.h.b16 %v554
        %v718 = vunpack.c.l.b16 %v555
        %v719 = vunpack.c.l.b16 %v556
        %v720 = vunpack.c.h.b16 %v556
        %v721 = vunpack.c.l.b16 %v557
        %v722 = vunpack.c.l.b16 %v558
        %v723 = vunpack.c.h.b16 %v558
        %v724 = vunpack.c.l.b16 %v559
        %v725 = vunpack.c.l.b16 %v560
        %v726 = vunpack.c.h.b16 %v560
        %v727 = vunpack.c.l.b16 %v561
        %v728 = vunpack.c.l.b16 %v562
        %v729 = vunpack.c.h.b16 %v562
        %v730 = vunpack.c.l.b16 %v563
        %v731 = vunpack.c.l.b16 %v564
        %v732 = vunpack.c.h.b16 %v564
        %v733 = vunpack.c.l.b16 %v565
        %v734 = vunpack.c.l.b16 %v566
        %v735 = vunpack.c.h.b16 %v566
        %v736 = vunpack.c.l.b16 %v567
        %v737 = vunpack.c.l.b16 %v568
        %v738 = vunpack.c.h.b16 %v568
        %v739 = vunpack.c.l.b16 %v569
        %v740 = vunpack.c.l.b16 %v570
        %v741 = vunpack.c.h.b16 %v570
        %v742 = vunpack.c.l.b16 %v571
        %v743 = vunpack.c.l.b16 %v572
        %v744 = vunpack.c.h.b16 %v572
        %v745 = vunpack.c.l.b16 %v573
        %v746 = vunpack.c.l.b16 %v574
        %v747 = vunpack.c.h.b16 %v574
        %v748 = vunpack.c.l.b16 %v575
        %v749 = vunpack.c.l.b16 %v576
        %v750 = vunpack.c.h.b16 %v576
        %v751 = vunpack.c.l.b16 %v577
        %v752 = vunpack.c.l.b16 %v578
        %v753 = vunpack.c.h.b16 %v578
        %v754 = vunpack.c.l.b16 %v579
        %v755 = vunpack.c.l.b16 %v580
        %v756 = vunpack.c.h.b16 %v580
        %v757 = vunpack.c.l.b16 %v581
        %v758 = vunpack.c.l.b16 %v582
        %v759 = vunpack.c.h.b16 %v582
        %v760 = vunpack.c.l.b16 %v583
        %v761 = vunpack.c.l.b16 %v584
        %v762 = vunpack.c.h.b16 %v584
        %v763 = vunpack.c.l.b16 %v585
        %v764 = vpack.c.b16 %v689, %v686
        %v765 = vpack.c.b16 %v690, %v687
        %v766 = vpack.c.b16 %v691, %v688
        %v767 = vpack.c.b16 %v695, %v692
        %v768 = vpack.c.b16 %v696, %v693
        %v769 = vpack.c.b16 %v697, %v694
        %v770 = vpack.c.b16 %v701, %v698
        %v771 = vpack.c.b16 %v702, %v699
        %v772 = vpack.c.b16 %v703, %v700
        %v773 = vpack.c.b16 %v707, %v704
        %v774 = vpack.c.b16 %v708, %v705
        %v775 = vpack.c.b16 %v709, %v706
        %v776 = vpack.c.b16 %v713, %v710
        %v777 = vpack.c.b16 %v714, %v711
        %v778 = vpack.c.b16 %v715, %v712
        %v779 = vpack.c.b16 %v719, %v716
        %v780 = vpack.c.b16 %v720, %v717
        %v781 = vpack.c.b16 %v721, %v718
        %v782 = vpack.c.b16 %v725, %v722
        %v783 = vpack.c.b16 %v726, %v723
        %v784 = vpack.c.b16 %v727, %v724
        %v785 = vpack.c.b16 %v731, %v728
        %v786 = vpack.c.b16 %v732, %v729
        %v787 = vpack.c.b16 %v733, %v730
        %v788 = vpack.c.b16 %v737, %v734
        %v789 = vpack.c.b16 %v738, %v735
        %v790 = vpack.c.b16 %v739, %v736
        %v791 = vpack.c.b16 %v743, %v740
        %v792 = vpack.c.b16 %v744, %v741
        %v793 = vpack.c.b16 %v745, %v742
        %v794 = vpack.c.b16 %v749, %v746
        %v795 = vpack.c.b16 %v750, %v747
        %v796 = vpack.c.b16 %v751, %v748
        %v797 = vpack.c.b16 %v755, %v752
        %v798 = vpack.c.b16 %v756, %v753
        %v799 = vpack.c.b16 %v757, %v754
        %v800 = vpack.c.b16 %v761, %v758
        %v801 = vpack.c.b16 %v762, %v759
        %v802 = vpack.c.b16 %v763, %v760
        %v890 = vunpack.c.l.b16 %v586
        %v891 = vunpack.c.l.b16 %v587
        %v892 = vunpack.c.l.b16 %v588
        %v893 = vunpack.c.l.b16 %v589
        %v894 = vunpack.c.l.b16 %v590
        %v895 = vunpack.c.l.b16 %v591
        %v896 = vunpack.c.l.b16 %v592
        %v897 = vunpack.c.l.b16 %v593
        %v898 = vunpack.c.l.b16 %v594
        %v899 = vunpack.c.l.b16 %v595
        %v900 = vunpack.c.l.b16 %v596
        %v901 = vunpack.c.l.b16 %v597
        %v902 = vunpack.c.l.b16 %v598
        %v903 = vunpack.c.l.b16 %v599
        %v904 = vunpack.c.l.b16 %v600
        %v905 = vunpack.c.l.b16 %v601
        %v906 = vunpack.c.l.b16 %v602
        %v907 = vunpack.c.l.b16 %v603
        %v908 = vunpack.c.l.b16 %v604
        %v909 = vunpack.c.l.b16 %v605
        %v910 = vunpack.c.l.b16 %v606
        %v911 = vunpack.c.l.b16 %v607
        %v912 = vunpack.c.l.b16 %v608
        %v913 = vunpack.c.l.b16 %v609
        %v914 = vunpack.c.l.b16 %v610
        %v915 = vunpack.c.l.b16 %v611
        %v916 = vunpack.c.l.b16 %v612
        %v917 = vunpack.c.l.b16 %v613
        %v918 = vunpack.c.l.b16 %v614
        %v919 = vunpack.c.l.b16 %v615
        %v920 = vunpack.c.l.b16 %v616
        %v921 = vunpack.c.l.b16 %v617
        %v922 = vunpack.c.l.b16 %v618
        %v923 = vunpack.c.l.b16 %v619
        %v924 = vunpack.c.l.b16 %v620
        %v925 = vunpack.c.l.b16 %v621
        %v926 = vunpack.c.l.b16 %v622
        %v927 = vunpack.c.l.b16 %v623
        %v928 = vunpack.c.l.b16 %v624
        %v929 = vunpack.c.l.b16 %v625
        %v930 = vunpack.c.l.b16 %v626
        %v931 = vunpack.c.l.b16 %v627
        %v932 = vunpack.c.l.b16 %v628
        %v933 = vunpack.c.l.b16 %v629
        %v934 = vunpack.c.l.b16 %v630
        %v935 = vunpack.c.l.b16 %v631
        %v936 = vunpack.c.l.b16 %v632
        %v937 = vunpack.c.l.b16 %v633
        %v938 = vpack.c.b16 %v891, %v890
        %v939 = vpack.c.b16 %v893, %v892
        %v940 = vpack.c.b16 %v895, %v894
        %v941 = vpack.c.b16 %v897, %v896
        %v942 = vpack.c.b16 %v899, %v898
        %v943 = vpack.c.b16 %v901, %v900
        %v944 = vpack.c.b16 %v903, %v902
        %v945 = vpack.c.b16 %v905, %v904
        %v946 = vpack.c.b16 %v907, %v906
        %v947 = vpack.c.b16 %v909, %v908
        %v948 = vpack.c.b16 %v911, %v910
        %v949 = vpack.c.b16 %v913, %v912
        %v950 = vpack.c.b16 %v915, %v914
        %v951 = vpack.c.b16 %v917, %v916
        %v952 = vpack.c.b16 %v919, %v918
        %v953 = vpack.c.b16 %v921, %v920
        %v954 = vpack.c.b16 %v923, %v922
        %v955 = vpack.c.b16 %v925, %v924
        %v956 = vpack.c.b16 %v927, %v926
        %v957 = vpack.c.b16 %v929, %v928
        %v958 = vpack.c.b16 %v931, %v930
        %v959 = vpack.c.b16 %v933, %v932
        %v960 = vpack.c.b16 %v935, %v934
        %v961 = vpack.c.b16 %v937, %v936
        %986 = vmatprep.subr.bf16.mxu0 0
        %987 = vmatpush1.bf16.msra.mxu0 %v938
        %988 = vmatprep.subr.bf16.mxu0 0
        %989 = vmatpush1.bf16.msra.mxu0 %v939
        %990 = vmatprep.subr.bf16.mxu0 0
        %991 = vmatpush1.bf16.msra.mxu0 %v940
        %992 = vmatprep.subr.bf16.mxu0 0
        %993 = vmatpush1.bf16.msra.mxu0 %v941
        %994 = vmatprep.subr.bf16.mxu0 0
        %995 = vmatpush1.bf16.msra.mxu0 %v942
        %996 = vmatprep.subr.bf16.mxu0 0
        %997 = vmatpush1.bf16.msra.mxu0 %v943
        %998 = vmatprep.subr.bf16.mxu0 0
        %999 = vmatpush1.bf16.msra.mxu0 %v944
        %1000 = vmatprep.subr.bf16.mxu0 0
        %1001 = vmatpush1.bf16.msra.mxu0 %v945
        %1002 = vmatprep.subr.bf16.mxu0 0
        %1003 = vmatpush1.bf16.msra.mxu0 %v946
        %1004 = vmatprep.subr.bf16.mxu0 0
        %1005 = vmatpush1.bf16.msra.mxu0 %v947
        %1006 = vmatprep.subr.bf16.mxu0 0
        %1007 = vmatpush1.bf16.msra.mxu0 %v948
        %1008 = vmatprep.subr.bf16.mxu0 0
        %1009 = vmatpush1.bf16.msra.mxu0 %v949
        %1010 = vmatprep.subr.bf16.mxu0 0
        %1011 = vmatpush1.bf16.msra.mxu0 %v950
        %1012 = vmatprep.subr.bf16.mxu0 0
        %1013 = vmatpush1.bf16.msra.mxu0 %v951
        %1014 = vmatprep.subr.bf16.mxu0 0
        %1015 = vmatpush1.bf16.msra.mxu0 %v952
        %1016 = vmatprep.subr.bf16.mxu0 0
        %1017 = vmatpush1.bf16.msra.mxu0 %v953
        %1018 = vmatprep.mubr.bf16.mxu0 %v765
        %1019 = vmatmul.mubr.bf16.gmra.mrb[0].mxu0 %v764
        %v1020 = vpop.f32.mrb[0].mxu0
        %v1021 = vadd.f32 0.0, %v1020
        %v1022 = vpop.f32.mrb[0].mxu0
        %v1023 = vpop.f32.mrb[0].mxu0
        %v1024 = vadd.f32 0.0, %v1023
        %v1025 = vpop.f32.mrb[0].mxu0
        %1026 = vmatprep.mubr.bf16.mxu0 %v768
        %1027 = vmatmul.mubr.bf16.gmra.mrb[0].mxu0 %v767
        %v1028 = vpop.f32.mrb[0].mxu0
        %v1029 = vadd.f32 0.0, %v1028
        %v1030 = vpop.f32.mrb[0].mxu0
        %v1031 = vpop.f32.mrb[0].mxu0
        %v1032 = vadd.f32 0.0, %v1031
        %v1033 = vpop.f32.mrb[0].mxu0
        %1034 = vmatprep.mubr.bf16.mxu0 %v771
        %1035 = vmatmul.mubr.bf16.gmra.mrb[0].mxu0 %v770
        %v1036 = vpop.f32.mrb[0].mxu0
        %v1037 = vadd.f32 0.0, %v1036
        %v1038 = vpop.f32.mrb[0].mxu0
        %v1039 = vpop.f32.mrb[0].mxu0
        %v1040 = vadd.f32 0.0, %v1039
        %v1041 = vpop.f32.mrb[0].mxu0
        %1042 = vmatprep.mubr.bf16.mxu0 %v774
        %1043 = vmatmul.mubr.bf16.gmra.mrb[0].mxu0 %v773
        %v1044 = vpop.f32.mrb[0].mxu0
        %v1045 = vadd.f32 0.0, %v1044
        %v1046 = vpop.f32.mrb[0].mxu0
        %v1047 = vpop.f32.mrb[0].mxu0
        %v1048 = vadd.f32 0.0, %v1047
        %v1049 = vpop.f32.mrb[0].mxu0
        %1050 = vmatprep.mubr.bf16.mxu0 %v777
        %1051 = vmatmul.mubr.bf16.gmra.mrb[0].mxu0 %v776
        %v1052 = vpop.f32.mrb[0].mxu0
        %v1053 = vadd.f32 0.0, %v1052
        %v1054 = vpop.f32.mrb[0].mxu0
        %v1055 = vpop.f32.mrb[0].mxu0
        %v1056 = vadd.f32 0.0, %v1055
        %v1057 = vpop.f32.mrb[0].mxu0
        %1058 = vmatprep.mubr.bf16.mxu0 %v780
        %1059 = vmatmul.mubr.bf16.gmra.mrb[0].mxu0 %v779
        %v1060 = vpop.f32.mrb[0].mxu0
        %v1061 = vadd.f32 0.0, %v1060
        %v1062 = vpop.f32.mrb[0].mxu0
        %v1063 = vpop.f32.mrb[0].mxu0
        %v1064 = vadd.f32 0.0, %v1063
        %v1065 = vpop.f32.mrb[0].mxu0
        %1066 = vmatprep.mubr.bf16.mxu0 %v783
        %1067 = vmatmul.mubr.bf16.gmra.mrb[0].mxu0 %v782
        %v1068 = vpop.f32.mrb[0].mxu0
        %v1069 = vadd.f32 0.0, %v1068
        %v1070 = vpop.f32.mrb[0].mxu0
        %v1071 = vpop.f32.mrb[0].mxu0
        %v1072 = vadd.f32 0.0, %v1071
        %v1073 = vpop.f32.mrb[0].mxu0
        %1074 = vmatprep.mubr.bf16.mxu0 %v786
        %1075 = vmatmul.mubr.bf16.gmra.mrb[0].mxu0 %v785
        %v1076 = vpop.f32.mrb[0].mxu0
        %v1077 = vadd.f32 0.0, %v1076
        %v1078 = vpop.f32.mrb[0].mxu0
        %v1079 = vpop.f32.mrb[0].mxu0
        %v1080 = vadd.f32 0.0, %v1079
        %v1081 = vpop.f32.mrb[0].mxu0
        %1082 = vmatprep.mubr.bf16.mxu0 %v789
        %1083 = vmatmul.mubr.bf16.gmra.mrb[0].mxu0 %v788
        %v1084 = vpop.f32.mrb[0].mxu0
        %v1085 = vadd.f32 0.0, %v1084
        %v1086 = vpop.f32.mrb[0].mxu0
        %v1087 = vpop.f32.mrb[0].mxu0
        %v1088 = vadd.f32 0.0, %v1087
        %v1089 = vpop.f32.mrb[0].mxu0
        %1090 = vmatprep.mubr.bf16.mxu0 %v792
        %1091 = vmatmul.mubr.bf16.gmra.mrb[0].mxu0 %v791
        %v1092 = vpop.f32.mrb[0].mxu0
        %v1093 = vadd.f32 0.0, %v1092
        %v1094 = vpop.f32.mrb[0].mxu0
        %v1095 = vpop.f32.mrb[0].mxu0
        %v1096 = vadd.f32 0.0, %v1095
        %v1097 = vpop.f32.mrb[0].mxu0
        %1098 = vmatprep.mubr.bf16.mxu0 %v795
        %1099 = vmatmul.mubr.bf16.gmra.mrb[0].mxu0 %v794
        %v1100 = vpop.f32.mrb[0].mxu0
        %v1101 = vadd.f32 0.0, %v1100
        %v1102 = vpop.f32.mrb[0].mxu0
        %v1103 = vpop.f32.mrb[0].mxu0
        %v1104 = vadd.f32 0.0, %v1103
        %v1105 = vpop.f32.mrb[0].mxu0
        %1106 = vmatprep.mubr.bf16.mxu0 %v798
        %1107 = vmatmul.mubr.bf16.gmra.mrb[0].mxu0 %v797
        %v1108 = vpop.f32.mrb[0].mxu0
        %v1109 = vadd.f32 0.0, %v1108
        %v1110 = vpop.f32.mrb[0].mxu0
        %v1111 = vpop.f32.mrb[0].mxu0
        %v1112 = vadd.f32 0.0, %v1111
        %v1113 = vpop.f32.mrb[0].mxu0
        %1114 = vmatprep.mubr.bf16.mxu0 %v801
        %1115 = vmatmul.mubr.bf16.gmra.mrb[0].mxu0 %v800
        %v1116 = vpop.f32.mrb[0].mxu0
        %v1117 = vadd.f32 0.0, %v1116
        %v1118 = vpop.f32.mrb[0].mxu0
        %v1119 = vpop.f32.mrb[0].mxu0
        %v1120 = vadd.f32 0.0, %v1119
        %v1121 = vpop.f32.mrb[0].mxu0
        %1122 = vdwg.mxu0
        %1123 = vmatprep.subr.bf16.mxu0 0
        %1124 = vmatpush1.bf16.msra.mxu0 %v954
        %1125 = vmatprep.subr.bf16.mxu0 0
        %1126 = vmatpush1.bf16.msra.mxu0 %v955
        %1127 = vmatprep.subr.bf16.mxu0 0
        %1128 = vmatpush1.bf16.msra.mxu0 %v956
        %1129 = vmatprep.subr.bf16.mxu0 0
        %1130 = vmatpush1.bf16.msra.mxu0 %v957
        %1131 = vmatprep.subr.bf16.mxu0 0
        %1132 = vmatpush1.bf16.msra.mxu0 %v958
        %1133 = vmatprep.subr.bf16.mxu0 0
        %1134 = vmatpush1.bf16.msra.mxu0 %v959
        %1135 = vmatprep.subr.bf16.mxu0 0
        %1136 = vmatpush1.bf16.msra.mxu0 %v960
        %1137 = vmatprep.subr.bf16.mxu0 0
        %1138 = vmatpush1.bf16.msra.mxu0 %v961
        %1139 = vmatprep.subr.bf16.mxu0 0
        %1140 = vmatpush1.bf16.msra.mxu0 0
        %1141 = vmatprep.subr.bf16.mxu0 0
        %1142 = vmatpush1.bf16.msra.mxu0 0
        %1143 = vmatprep.subr.bf16.mxu0 0
        %1144 = vmatpush1.bf16.msra.mxu0 0
        %1145 = vmatprep.subr.bf16.mxu0 0
        %1146 = vmatpush1.bf16.msra.mxu0 0
        %1147 = vmatprep.subr.bf16.mxu0 0
        %1148 = vmatpush1.bf16.msra.mxu0 0
        %1149 = vmatprep.subr.bf16.mxu0 0
        %1150 = vmatpush1.bf16.msra.mxu0 0
        %1151 = vmatprep.subr.bf16.mxu0 0
        %1152 = vmatpush1.bf16.msra.mxu0 0
        %1153 = vmatprep.subr.bf16.mxu0 0
        %1154 = vmatpush1.bf16.msra.mxu0 0
        %1155 = vmatprep.mubr.bf16.mxu0 0
        %1156 = vmatmul.mubr.bf16.gmra.mrb[0].mxu0 %v766
        %v1157 = vpop.f32.mrb[0].mxu0
        %v1158 = vadd.f32 %v1021, %v1157
        %v1159 = vpop.f32.mrb[0].mxu0
        %v1160 = vpop.f32.mrb[0].mxu0
        %v1161 = vadd.f32 %v1024, %v1160
        %v1162 = vpop.f32.mrb[0].mxu0
        %1163 = vmatprep.mubr.bf16.mxu0 0
        %1164 = vmatmul.mubr.bf16.gmra.mrb[0].mxu0 %v769
        %v1165 = vpop.f32.mrb[0].mxu0
        %v1166 = vadd.f32 %v1029, %v1165
        %v1167 = vpop.f32.mrb[0].mxu0
        %v1168 = vpop.f32.mrb[0].mxu0
        %v1169 = vadd.f32 %v1032, %v1168
        %v1170 = vpop.f32.mrb[0].mxu0
        %1171 = vmatprep.mubr.bf16.mxu0 0
        %1172 = vmatmul.mubr.bf16.gmra.mrb[0].mxu0 %v772
        %v1173 = vpop.f32.mrb[0].mxu0
        %v1174 = vadd.f32 %v1037, %v1173
        %v1175 = vpop.f32.mrb[0].mxu0
        %v1176 = vpop.f32.mrb[0].mxu0
        %v1177 = vadd.f32 %v1040, %v1176
        %v1178 = vpop.f32.mrb[0].mxu0
        %1179 = vmatprep.mubr.bf16.mxu0 0
        %1180 = vmatmul.mubr.bf16.gmra.mrb[0].mxu0 %v775
        %v1181 = vpop.f32.mrb[0].mxu0
        %v1182 = vadd.f32 %v1045, %v1181
        %v1183 = vpop.f32.mrb[0].mxu0
        %v1184 = vpop.f32.mrb[0].mxu0
        %v1185 = vadd.f32 %v1048, %v1184
        %v1186 = vpop.f32.mrb[0].mxu0
        %1187 = vmatprep.mubr.bf16.mxu0 0
        %1188 = vmatmul.mubr.bf16.gmra.mrb[0].mxu0 %v778
        %v1189 = vpop.f32.mrb[0].mxu0
        %v1190 = vadd.f32 %v1053, %v1189
        %v1191 = vpop.f32.mrb[0].mxu0
        %v1192 = vpop.f32.mrb[0].mxu0
        %v1193 = vadd.f32 %v1056, %v1192
        %v1194 = vpop.f32.mrb[0].mxu0
        %1195 = vmatprep.mubr.bf16.mxu0 0
        %1196 = vmatmul.mubr.bf16.gmra.mrb[0].mxu0 %v781
        %v1197 = vpop.f32.mrb[0].mxu0
        %v1198 = vadd.f32 %v1061, %v1197
        %v1199 = vpop.f32.mrb[0].mxu0
        %v1200 = vpop.f32.mrb[0].mxu0
        %v1201 = vadd.f32 %v1064, %v1200
        %v1202 = vpop.f32.mrb[0].mxu0
        %1203 = vmatprep.mubr.bf16.mxu0 0
        %1204 = vmatmul.mubr.bf16.gmra.mrb[0].mxu0 %v784
        %v1205 = vpop.f32.mrb[0].mxu0
        %v1206 = vadd.f32 %v1069, %v1205
        %v1207 = vpop.f32.mrb[0].mxu0
        %v1208 = vpop.f32.mrb[0].mxu0
        %v1209 = vadd.f32 %v1072, %v1208
        %v1210 = vpop.f32.mrb[0].mxu0
        %1211 = vmatprep.mubr.bf16.mxu0 0
        %1212 = vmatmul.mubr.bf16.gmra.mrb[0].mxu0 %v787
        %v1213 = vpop.f32.mrb[0].mxu0
        %v1214 = vadd.f32 %v1077, %v1213
        %v1215 = vpop.f32.mrb[0].mxu0
        %v1216 = vpop.f32.mrb[0].mxu0
        %v1217 = vadd.f32 %v1080, %v1216
        %v1218 = vpop.f32.mrb[0].mxu0
        %1219 = vmatprep.mubr.bf16.mxu0 0
        %1220 = vmatmul.mubr.bf16.gmra.mrb[0].mxu0 %v790
        %v1221 = vpop.f32.mrb[0].mxu0
        %v1222 = vadd.f32 %v1085, %v1221
        %v1223 = vpop.f32.mrb[0].mxu0
        %v1224 = vpop.f32.mrb[0].mxu0
        %v1225 = vadd.f32 %v1088, %v1224
        %v1226 = vpop.f32.mrb[0].mxu0
        %1227 = vmatprep.mubr.bf16.mxu0 0
        %1228 = vmatmul.mubr.bf16.gmra.mrb[0].mxu0 %v793
        %v1229 = vpop.f32.mrb[0].mxu0
        %v1230 = vadd.f32 %v1093, %v1229
        %v1231 = vpop.f32.mrb[0].mxu0
        %v1232 = vpop.f32.mrb[0].mxu0
        %v1233 = vadd.f32 %v1096, %v1232
        %v1234 = vpop.f32.mrb[0].mxu0
        %1235 = vmatprep.mubr.bf16.mxu0 0
        %1236 = vmatmul.mubr.bf16.gmra.mrb[0].mxu0 %v796
        %v1237 = vpop.f32.mrb[0].mxu0
        %v1238 = vadd.f32 %v1101, %v1237
        %v1239 = vpop.f32.mrb[0].mxu0
        %v1240 = vpop.f32.mrb[0].mxu0
        %v1241 = vadd.f32 %v1104, %v1240
        %v1242 = vpop.f32.mrb[0].mxu0
        %1243 = vmatprep.mubr.bf16.mxu0 0
        %1244 = vmatmul.mubr.bf16.gmra.mrb[0].mxu0 %v799
        %v1245 = vpop.f32.mrb[0].mxu0
        %v1246 = vadd.f32 %v1109, %v1245
        %v1247 = vpop.f32.mrb[0].mxu0
        %v1248 = vpop.f32.mrb[0].mxu0
        %v1249 = vadd.f32 %v1112, %v1248
        %v1250 = vpop.f32.mrb[0].mxu0
        %1251 = vmatprep.mubr.bf16.mxu0 0
        %1252 = vmatmul.mubr.bf16.gmra.mrb[0].mxu0 %v802
        %v1253 = vpop.f32.mrb[0].mxu0
        %v1254 = vadd.f32 %v1117, %v1253
        %v1255 = vpop.f32.mrb[0].mxu0
        %v1256 = vpop.f32.mrb[0].mxu0
        %v1257 = vadd.f32 %v1120, %v1256
        %v1258 = vpop.f32.mrb[0].mxu0
        %1259 = vdwg.mxu0
        %v1260 = vadd.f32 %v508, %v1158
        %v1261 = vadd.f32 %v509, %v1161
        %v1262 = vadd.f32 %v510, %v1166
        %v1263 = vadd.f32 %v511, %v1169
        %v1264 = vadd.f32 %v512, %v1174
        %v1265 = vadd.f32 %v513, %v1177
        %v1266 = vadd.f32 %v514, %v1182
        %v1267 = vadd.f32 %v515, %v1185
        %v1268 = vadd.f32 %v516, %v1190
        %v1269 = vadd.f32 %v517, %v1193
        %v1270 = vadd.f32 %v518, %v1198
        %v1271 = vadd.f32 %v519, %v1201
        %v1272 = vadd.f32 %v520, %v1206
        %v1273 = vadd.f32 %v521, %v1209
        %v1274 = vadd.f32 %v522, %v1214
        %v1275 = vadd.f32 %v523, %v1217
        %v1276 = vadd.f32 %v524, %v1222
        %v1277 = vadd.f32 %v525, %v1225
        %v1278 = vadd.f32 %v526, %v1230
        %v1279 = vadd.f32 %v527, %v1233
        %v1280 = vadd.f32 %v528, %v1238
        %v1281 = vadd.f32 %v529, %v1241
        %v1282 = vadd.f32 %v530, %v1246
        %v1283 = vadd.f32 %v531, %v1249
        %v1284 = vadd.f32 %v532, %v1254
        %v1285 = vadd.f32 %v533, %v1257
        %1286 = vst [vmem:[%s459] sm:$0xff] %v1260
        %1287 = vst [vmem:[%s459 + $0x8] sm:$0xff] %v1261
        %1288 = vst [vmem:[%s459 + $0x10] sm:$0xff] %v1262
        %1289 = vst [vmem:[%s459 + $0x18] sm:$0xff] %v1263
        %1290 = vst [vmem:[%s459 + $0x20] sm:$0xff] %v1264
        %1291 = vst [vmem:[%s459 + $0x28] sm:$0xff] %v1265
        %1292 = vst [vmem:[%s459 + $0x30] sm:$0xff] %v1266
        %1293 = vst [vmem:[%s459 + $0x38] sm:$0xff] %v1267
        %1294 = vst [vmem:[%s459 + $0x40] sm:$0xff] %v1268
        %1295 = vst [vmem:[%s459 + $0x48] sm:$0xff] %v1269
        %1296 = vst [vmem:[%s459 + $0x50] sm:$0xff] %v1270
        %1297 = vst [vmem:[%s459 + $0x58] sm:$0xff] %v1271
        %1298 = vst [vmem:[%s459 + $0x60] sm:$0xff] %v1272
        %1299 = vst [vmem:[%s459 + $0x68] sm:$0xff] %v1273
        %1300 = vst [vmem:[%s459 + $0x70] sm:$0xff] %v1274
        %1301 = vst [vmem:[%s459 + $0x78] sm:$0xff] %v1275
        %1302 = vst [vmem:[%s459 + $0x80] sm:$0xff] %v1276
        %1303 = vst [vmem:[%s459 + $0x88] sm:$0xff] %v1277
        %1304 = vst [vmem:[%s459 + $0x90] sm:$0xff] %v1278
        %1305 = vst [vmem:[%s459 + $0x98] sm:$0xff] %v1279
        %1306 = vst [vmem:[%s459 + $0xa0] sm:$0xff] %v1280
        %1307 = vst [vmem:[%s459 + $0xa8] sm:$0xff] %v1281
        %1308 = vst [vmem:[%s459 + $0xb0] sm:$0xff] %v1282
        %1309 = vst [vmem:[%s459 + $0xb8] sm:$0xff] %v1283
        %1310 = vst [vmem:[%s459 + $0xc0] sm:$0xff] %v1284
        %1311 = vst [vmem:[%s459 + $0xc8] sm:$0xff] %v1285
        // Predicated region
        $region78: #{_linear_padded.1} parent=68 // pred_check
          %p1312 = pneg %p478
        $region79: #{_linear_padded.1} parent=68 // pred_check_branch
          %1314 = sbr.rel (%p1312) target = $region81
        $region80: #{_linear_padded.1} parent=68 // pred_region
          %v1315 = vld [vmem:[%s459] sm:$0xff]
          %v1316 = vld [vmem:[%s459 + $0x8] sm:$0xff]
          %v1317 = vld [vmem:[%s459 + $0x10] sm:$0xff]
          %v1318 = vld [vmem:[%s459 + $0x18] sm:$0xff]
          %v1319 = vld [vmem:[%s459 + $0x20] sm:$0xff]
          %v1320 = vld [vmem:[%s459 + $0x28] sm:$0xff]
          %v1321 = vld [vmem:[%s459 + $0x30] sm:$0xff]
          %v1322 = vld [vmem:[%s459 + $0x38] sm:$0xff]
          %v1323 = vld [vmem:[%s459 + $0x40] sm:$0xff]
          %v1324 = vld [vmem:[%s459 + $0x48] sm:$0xff]
          %v1325 = vld [vmem:[%s459 + $0x50] sm:$0xff]
          %v1326 = vld [vmem:[%s459 + $0x58] sm:$0xff]
          %v1327 = vld [vmem:[%s459 + $0x60] sm:$0xff]
          %v1328 = vld [vmem:[%s459 + $0x68] sm:$0xff]
          %v1329 = vld [vmem:[%s459 + $0x70] sm:$0xff]
          %v1330 = vld [vmem:[%s459 + $0x78] sm:$0xff]
          %v1331 = vld [vmem:[%s459 + $0x80] sm:$0xff]
          %v1332 = vld [vmem:[%s459 + $0x88] sm:$0xff]
          %v1333 = vld [vmem:[%s459 + $0x90] sm:$0xff]
          %v1334 = vld [vmem:[%s459 + $0x98] sm:$0xff]
          %v1335 = vld [vmem:[%s459 + $0xa0] sm:$0xff]
          %v1336 = vld [vmem:[%s459 + $0xa8] sm:$0xff]
          %v1337 = vld [vmem:[%s459 + $0xb0] sm:$0xff]
          %v1338 = vld [vmem:[%s459 + $0xb8] sm:$0xff]
          %v1339 = vld [vmem:[%s459 + $0xc0] sm:$0xff]
          %v1340 = vld [vmem:[%s459 + $0xc8] sm:$0xff]
          %v1341 = vld [vmem:[%s475] sm:$0x1]
          %v1343 = vlaneseq
          %v1344 = vshrl.u32 %v1343, 7
          %v1345 = vsub.s32 0, %v1344
          %v1346 = vrot.slane %v1341, %v1345
          %v1348 = vadd.f32 %v1315, %v1346
          %v1349 = vadd.f32 %v1316, %v1346
          %v1350 = vadd.f32 %v1317, %v1346
          %v1351 = vadd.f32 %v1318, %v1346
          %v1352 = vadd.f32 %v1319, %v1346
          %v1353 = vadd.f32 %v1320, %v1346
          %v1354 = vadd.f32 %v1321, %v1346
          %v1355 = vadd.f32 %v1322, %v1346
          %v1356 = vadd.f32 %v1323, %v1346
          %v1357 = vadd.f32 %v1324, %v1346
          %v1358 = vadd.f32 %v1325, %v1346
          %v1359 = vadd.f32 %v1326, %v1346
          %v1360 = vadd.f32 %v1327, %v1346
          %v1361 = vadd.f32 %v1328, %v1346
          %v1362 = vadd.f32 %v1329, %v1346
          %v1363 = vadd.f32 %v1330, %v1346
          %v1364 = vadd.f32 %v1331, %v1346
          %v1365 = vadd.f32 %v1332, %v1346
          %v1366 = vadd.f32 %v1333, %v1346
          %v1367 = vadd.f32 %v1334, %v1346
          %v1368 = vadd.f32 %v1335, %v1346
          %v1369 = vadd.f32 %v1336, %v1346
          %v1370 = vadd.f32 %v1337, %v1346
          %v1371 = vadd.f32 %v1338, %v1346
          %v1372 = vadd.f32 %v1339, %v1346
          %v1373 = vadd.f32 %v1340, %v1346
          %1374 = vst [vmem:[%s459] sm:$0xff] %v1348
          %1375 = vst [vmem:[%s459 + $0x8] sm:$0xff] %v1349
          %1376 = vst [vmem:[%s459 + $0x10] sm:$0xff] %v1350
          %1377 = vst [vmem:[%s459 + $0x18] sm:$0xff] %v1351
          %1378 = vst [vmem:[%s459 + $0x20] sm:$0xff] %v1352
          %1379 = vst [vmem:[%s459 + $0x28] sm:$0xff] %v1353
          %1380 = vst [vmem:[%s459 + $0x30] sm:$0xff] %v1354
          %1381 = vst [vmem:[%s459 + $0x38] sm:$0xff] %v1355
          %1382 = vst [vmem:[%s459 + $0x40] sm:$0xff] %v1356
          %1383 = vst [vmem:[%s459 + $0x48] sm:$0xff] %v1357
          %1384 = vst [vmem:[%s459 + $0x50] sm:$0xff] %v1358
          %1385 = vst [vmem:[%s459 + $0x58] sm:$0xff] %v1359
          %1386 = vst [vmem:[%s459 + $0x60] sm:$0xff] %v1360
          %1387 = vst [vmem:[%s459 + $0x68] sm:$0xff] %v1361
          %1388 = vst [vmem:[%s459 + $0x70] sm:$0xff] %v1362
          %1389 = vst [vmem:[%s459 + $0x78] sm:$0xff] %v1363
          %1390 = vst [vmem:[%s459 + $0x80] sm:$0xff] %v1364
          %1391 = vst [vmem:[%s459 + $0x88] sm:$0xff] %v1365
          %1392 = vst [vmem:[%s459 + $0x90] sm:$0xff] %v1366
          %1393 = vst [vmem:[%s459 + $0x98] sm:$0xff] %v1367
          %1394 = vst [vmem:[%s459 + $0xa0] sm:$0xff] %v1368
          %1395 = vst [vmem:[%s459 + $0xa8] sm:$0xff] %v1369
          %1396 = vst [vmem:[%s459 + $0xb0] sm:$0xff] %v1370
          %1397 = vst [vmem:[%s459 + $0xb8] sm:$0xff] %v1371
          %1398 = vst [vmem:[%s459 + $0xc0] sm:$0xff] %v1372
          %1399 = vst [vmem:[%s459 + $0xc8] sm:$0xff] %v1373
        $region81: #{_linear_padded.1} parent=68 // pred_fallthru
          _
        %s1400 = sand.u32 %s125, 1
        %s1401 = sand.u32 %s125, 1
        %s1402 = smul.addr %s1401, 208
        %s1403 = scalar_lea.vmem [#allocation3], %s1402
        // Predicated region
        $region82: #{_linear_padded.1} parent=68 // pred_check
          %p1404 = pneg %p135
        $region83: #{_linear_padded.1} parent=68 // pred_check_branch
          %1406 = sbr.rel (%p1404) target = $region85
        $region84: #{_linear_padded.1} parent=68 // pred_region
          %s1407 = smul.u32 26, %s19
          %s1408 = smul.addr %s1407, 2
          %s1409 = sadd.s32 %s20, %s1408
          %s1410 = smul.addr %s1409, 8
          %s1411 = scalar_lea.vmem %s3, %s1410
          // Predicated region
          $region86: #{_linear_padded.1} parent=84 // pred_check
            _
          $region87: #{_linear_padded.1} parent=84 // pred_check_branch
            %1413 = sbr.rel (0) target = $region89
          $region88: #{_linear_padded.1} parent=84 // pred_region
            // Predicated region
            $region90: #{_linear_padded.1} parent=88 // pred_check
              _
            $region91: #{_linear_padded.1} parent=88 // pred_check_branch
              %1415 = sbr.rel (0) target = $region93
            $region92: #{_linear_padded.1} parent=88 // pred_region
              // Predicated region
              $region105: #{_linear_padded.1} parent=92 // pred_check
                _
              $region106: #{_linear_padded.1} parent=92 // pred_check_branch
                %1480 = sbr.rel (0) target = $region108
              $region107: #{_linear_padded.1} parent=92 // pred_region
                loop: start=0, step=1, limit=1
                $region109: #{_linear_padded.1} parent=107 // loop_pre_header
                  _
                $region110: #{_linear_padded.1} parent=107 // loop_header
                  %s1482 = sphi 0, %s1486
                  %p1483 = scmp.ge.s32.totalorder %s1482, 1
                  %s1487 = sphi %s1403, %s1403
                  %s1488 = sphi %s1411, %s1411
                $region111: #{_linear_padded.1} parent=107 // loop_header_branch
                  %1485 = sbr.rel (%p1483) target = $region115
                $region112: #{_linear_padded.1} parent=107 // loop_body
                  %v1489 = vld [vmem:[%s1487] sm:$0xff]
                  %1490 = vst [vmem:[%s1488] sm:$0xff] %v1489
                  %v1491 = vld [vmem:[%s1487 + $0x8] sm:$0xff]
                  %1492 = vst [vmem:[%s1488 + $0x10] sm:$0xff] %v1491
                  %v1493 = vld [vmem:[%s1487 + $0x10] sm:$0xff]
                  %1494 = vst [vmem:[%s1488 + $0x20] sm:$0xff] %v1493
                  %v1495 = vld [vmem:[%s1487 + $0x18] sm:$0xff]
                  %1496 = vst [vmem:[%s1488 + $0x30] sm:$0xff] %v1495
                  %v1497 = vld [vmem:[%s1487 + $0x20] sm:$0xff]
                  %1498 = vst [vmem:[%s1488 + $0x40] sm:$0xff] %v1497
                  %v1499 = vld [vmem:[%s1487 + $0x28] sm:$0xff]
                  %1500 = vst [vmem:[%s1488 + $0x50] sm:$0xff] %v1499
                  %v1501 = vld [vmem:[%s1487 + $0x30] sm:$0xff]
                  %1502 = vst [vmem:[%s1488 + $0x60] sm:$0xff] %v1501
                  %v1503 = vld [vmem:[%s1487 + $0x38] sm:$0xff]
                  %1504 = vst [vmem:[%s1488 + $0x70] sm:$0xff] %v1503
                  %v1505 = vld [vmem:[%s1487 + $0x40] sm:$0xff]
                  %1506 = vst [vmem:[%s1488 + $0x80] sm:$0xff] %v1505
                  %v1507 = vld [vmem:[%s1487 + $0x48] sm:$0xff]
                  %1508 = vst [vmem:[%s1488 + $0x90] sm:$0xff] %v1507
                  %v1509 = vld [vmem:[%s1487 + $0x50] sm:$0xff]
                  %1510 = vst [vmem:[%s1488 + $0xa0] sm:$0xff] %v1509
                  %v1511 = vld [vmem:[%s1487 + $0x58] sm:$0xff]
                  %1512 = vst [vmem:[%s1488 + $0xb0] sm:$0xff] %v1511
                  %v1513 = vld [vmem:[%s1487 + $0x60] sm:$0xff]
                  %1514 = vst [vmem:[%s1488 + $0xc0] sm:$0xff] %v1513
                  %v1515 = vld [vmem:[%s1487 + $0x68] sm:$0xff]
                  %1516 = vst [vmem:[%s1488 + $0xd0] sm:$0xff] %v1515
                  %v1517 = vld [vmem:[%s1487 + $0x70] sm:$0xff]
                  %1518 = vst [vmem:[%s1488 + $0xe0] sm:$0xff] %v1517
                  %v1519 = vld [vmem:[%s1487 + $0x78] sm:$0xff]
                  %1520 = vst [vmem:[%s1488 + $0xf0] sm:$0xff] %v1519
                  %v1521 = vld [vmem:[%s1487 + $0x80] sm:$0xff]
                  %1522 = vst [vmem:[%s1488 + $0x100] sm:$0xff] %v1521
                  %v1523 = vld [vmem:[%s1487 + $0x88] sm:$0xff]
                  %1524 = vst [vmem:[%s1488 + $0x110] sm:$0xff] %v1523
                  %v1525 = vld [vmem:[%s1487 + $0x90] sm:$0xff]
                  %1526 = vst [vmem:[%s1488 + $0x120] sm:$0xff] %v1525
                  %v1527 = vld [vmem:[%s1487 + $0x98] sm:$0xff]
                  %1528 = vst [vmem:[%s1488 + $0x130] sm:$0xff] %v1527
                  %v1529 = vld [vmem:[%s1487 + $0xa0] sm:$0xff]
                  %1530 = vst [vmem:[%s1488 + $0x140] sm:$0xff] %v1529
                  %v1531 = vld [vmem:[%s1487 + $0xa8] sm:$0xff]
                  %1532 = vst [vmem:[%s1488 + $0x150] sm:$0xff] %v1531
                  %v1533 = vld [vmem:[%s1487 + $0xb0] sm:$0xff]
                  %1534 = vst [vmem:[%s1488 + $0x160] sm:$0xff] %v1533
                  %v1535 = vld [vmem:[%s1487 + $0xb8] sm:$0xff]
                  %1536 = vst [vmem:[%s1488 + $0x170] sm:$0xff] %v1535
                  %v1537 = vld [vmem:[%s1487 + $0xc0] sm:$0xff]
                  %1538 = vst [vmem:[%s1488 + $0x180] sm:$0xff] %v1537
                  %v1539 = vld [vmem:[%s1487 + $0xc8] sm:$0xff]
                  %1540 = vst [vmem:[%s1488 + $0x190] sm:$0xff] %v1539
                $region113: #{_linear_padded.1} parent=107 // loop_footer
                  %s1486 = sadd.s32 1, %s1482
                $region114: #{_linear_padded.1} parent=107 // loop_footer_branch
                  %1481 = sbr.rel target = $region110
                $region115: #{_linear_padded.1} parent=107 // loop_exit
                  _
              $region108: #{_linear_padded.1} parent=92 // pred_fallthru
                _
              // Predicated region
              $region116: #{_linear_padded.1} parent=92 // pred_check
                _
              $region117: #{_linear_padded.1} parent=92 // pred_check_branch
                %1542 = sbr.rel target = $region119
              $region118: #{_linear_padded.1} parent=92 // pred_region
                _
              $region119: #{_linear_padded.1} parent=92 // pred_fallthru
                _
            $region93: #{_linear_padded.1} parent=88 // pred_fallthru
              _
            // Predicated region
            $region94: #{_linear_padded.1} parent=88 // pred_check
              _
            $region95: #{_linear_padded.1} parent=88 // pred_check_branch
              %1417 = sbr.rel target = $region97
            $region96: #{_linear_padded.1} parent=88 // pred_region
              loop: start=0, step=1, limit=1
              $region98: #{_linear_padded.1} parent=96 // loop_pre_header
                _
              $region99: #{_linear_padded.1} parent=96 // loop_header
                %s1420 = sphi 0, %s1424
                %p1421 = scmp.ge.s32.totalorder %s1420, 1
                %s1425 = sphi %s1403, %s1403
                %s1426 = sphi %s1411, %s1411
              $region100: #{_linear_padded.1} parent=96 // loop_header_branch
                %1423 = sbr.rel (%p1421) target = $region104
              $region101: #{_linear_padded.1} parent=96 // loop_body
                %v1427 = vld [vmem:[%s1425] sm:$0xff]
                %1428 = vst [vmem:[%s1426] sm:$0xff] %v1427
                %v1429 = vld [vmem:[%s1425 + $0x8] sm:$0xff]
                %1430 = vst [vmem:[%s1426 + $0x10] sm:$0xff] %v1429
                %v1431 = vld [vmem:[%s1425 + $0x10] sm:$0xff]
                %1432 = vst [vmem:[%s1426 + $0x20] sm:$0xff] %v1431
                %v1433 = vld [vmem:[%s1425 + $0x18] sm:$0xff]
                %1434 = vst [vmem:[%s1426 + $0x30] sm:$0xff] %v1433
                %v1435 = vld [vmem:[%s1425 + $0x20] sm:$0xff]
                %1436 = vst [vmem:[%s1426 + $0x40] sm:$0xff] %v1435
                %v1437 = vld [vmem:[%s1425 + $0x28] sm:$0xff]
                %1438 = vst [vmem:[%s1426 + $0x50] sm:$0xff] %v1437
                %v1439 = vld [vmem:[%s1425 + $0x30] sm:$0xff]
                %1440 = vst [vmem:[%s1426 + $0x60] sm:$0xff] %v1439
                %v1441 = vld [vmem:[%s1425 + $0x38] sm:$0xff]
                %1442 = vst [vmem:[%s1426 + $0x70] sm:$0xff] %v1441
                %v1443 = vld [vmem:[%s1425 + $0x40] sm:$0xff]
                %1444 = vst [vmem:[%s1426 + $0x80] sm:$0xff] %v1443
                %v1445 = vld [vmem:[%s1425 + $0x48] sm:$0xff]
                %1446 = vst [vmem:[%s1426 + $0x90] sm:$0xff] %v1445
                %v1447 = vld [vmem:[%s1425 + $0x50] sm:$0xff]
                %1448 = vst [vmem:[%s1426 + $0xa0] sm:$0xff] %v1447
                %v1449 = vld [vmem:[%s1425 + $0x58] sm:$0xff]
                %1450 = vst [vmem:[%s1426 + $0xb0] sm:$0xff] %v1449
                %v1451 = vld [vmem:[%s1425 + $0x60] sm:$0xff]
                %1452 = vst [vmem:[%s1426 + $0xc0] sm:$0xff] %v1451
                %v1453 = vld [vmem:[%s1425 + $0x68] sm:$0xff]
                %1454 = vst [vmem:[%s1426 + $0xd0] sm:$0xff] %v1453
                %v1455 = vld [vmem:[%s1425 + $0x70] sm:$0xff]
                %1456 = vst [vmem:[%s1426 + $0xe0] sm:$0xff] %v1455
                %v1457 = vld [vmem:[%s1425 + $0x78] sm:$0xff]
                %1458 = vst [vmem:[%s1426 + $0xf0] sm:$0xff] %v1457
                %v1459 = vld [vmem:[%s1425 + $0x80] sm:$0xff]
                %1460 = vst [vmem:[%s1426 + $0x100] sm:$0xff] %v1459
                %v1461 = vld [vmem:[%s1425 + $0x88] sm:$0xff]
                %1462 = vst [vmem:[%s1426 + $0x110] sm:$0xff] %v1461
                %v1463 = vld [vmem:[%s1425 + $0x90] sm:$0xff]
                %1464 = vst [vmem:[%s1426 + $0x120] sm:$0xff] %v1463
                %v1465 = vld [vmem:[%s1425 + $0x98] sm:$0xff]
                %1466 = vst [vmem:[%s1426 + $0x130] sm:$0xff] %v1465
                %v1467 = vld [vmem:[%s1425 + $0xa0] sm:$0xff]
                %1468 = vst [vmem:[%s1426 + $0x140] sm:$0xff] %v1467
                %v1469 = vld [vmem:[%s1425 + $0xa8] sm:$0xff]
                %1470 = vst [vmem:[%s1426 + $0x150] sm:$0xff] %v1469
                %v1471 = vld [vmem:[%s1425 + $0xb0] sm:$0xff]
                %1472 = vst [vmem:[%s1426 + $0x160] sm:$0xff] %v1471
                %v1473 = vld [vmem:[%s1425 + $0xb8] sm:$0xff]
                %1474 = vst [vmem:[%s1426 + $0x170] sm:$0xff] %v1473
                %v1475 = vld [vmem:[%s1425 + $0xc0] sm:$0xff]
                %1476 = vst [vmem:[%s1426 + $0x180] sm:$0xff] %v1475
                %v1477 = vld [vmem:[%s1425 + $0xc8] sm:$0xff]
                %1478 = vst [vmem:[%s1426 + $0x190] sm:$0xff] %v1477
              $region102: #{_linear_padded.1} parent=96 // loop_footer
                %s1424 = sadd.s32 1, %s1420
              $region103: #{_linear_padded.1} parent=96 // loop_footer_branch
                %1419 = sbr.rel target = $region99
              $region104: #{_linear_padded.1} parent=96 // loop_exit
                _
            $region97: #{_linear_padded.1} parent=88 // pred_fallthru
              _
          $region89: #{_linear_padded.1} parent=84 // pred_fallthru
            _
          %1543 = vnop
        $region85: #{_linear_padded.1} parent=68 // pred_fallthru
          _
      $region69: #{_linear_padded.1} parent=5 // pred_fallthru
        _
      %p1544 = scmp.le.s32.totalorder 2, %s9
      // Predicated region
      $region120: #{_linear_padded.1} parent=5 // pred_check
        %p1545 = pneg %p1544
      $region121: #{_linear_padded.1} parent=5 // pred_check_branch
        %1547 = sbr.rel (%p1545) target = $region123
      $region122: #{_linear_padded.1} parent=5 // pred_region
        %s1548 = ssub.s32 %s9, 2
        // Predicated region
        $region124: #{_linear_padded.1} parent=122 // pred_check
          %p1549 = pneg %p141
        $region125: #{_linear_padded.1} parent=122 // pred_check_branch
          %1551 = sbr.rel (%p1549) target = $region127
        $region126: #{_linear_padded.1} parent=122 // pred_region
          %s1552 = sand.u32 %s126, 1
          %s1553 = sand.u32 %s126, 1
          %s1554 = smul.addr %s1553, 208
          %s1555 = scalar_lea.vmem [#allocation3], %s1554
        $region127: #{_linear_padded.1} parent=122 // pred_fallthru
          _
      $region123: #{_linear_padded.1} parent=5 // pred_fallthru
        _
    $region6: #{_linear_padded.1} parent=1 // loop_footer
      %s13 = sadd.s32 1, %s9
    $region7: #{_linear_padded.1} parent=1 // loop_footer_branch
      %8 = sbr.rel target = $region3
    $region8: #{_linear_padded.1} parent=1 // loop_exit
      _

</llo_original>
